<compile_context>
chip_gen: v6e
topology: v6e:2x2x1
jax: 0.10.0
libtpu: 0.0.40
codegen_flags: <defaults>
</compile_context>

<pallas_src>
import math

import numpy as np

import jax
import jax.numpy as jnp
from jax.experimental import pallas as pl
from jax.experimental.pallas import tpu as pltpu

_LANE = 128     # lane offset of the odd-w output half inside banded weights
_NC_PAD = 128   # fc3 output padded to one full lane group (lane-dense store)


# ------------------------------ Pallas kernel ------------------------------

def _lenet5_kernel(xs_ref, wb1_ref, bc1_ref, wb2_ref, bc2_ref,
                   w1_ref, b1_ref, w2_ref, b2_ref, w3_ref, b3_ref, o_ref):
    """Fused LeNet-5 forward for one batch tile (BT images).

    xs_ref : (1, 28*BT, 480)  h-only im2col slab; rows ordered
                              (row-parity group q, t, image), K = kh*96 + w*C + c
    wb1_ref: (480, 256)       conv1 banded weights, kh concatenated along rows;
                              even-w outputs in cols [0:84], odd-w in [128:212]
    wb2_ref: (5, 84, 256)     conv2 banded weights per kh; even/odd-w split as above
    w1_ref : (5, 80, 120)     fc1 weights permuted to (h, w*16+c, n)
    w3/b3  : padded to 128 output columns (lane-dense single store)
    """
    BT = o_ref.shape[0]              # images in this grid step
    h1 = bc1_ref.shape[1]            # 84 = 14 pooled-w * 6 channels
    h2 = bc2_ref.shape[1]            # 80 = 5  pooled-w * 16 channels
    g1 = 7 * BT                      # rows per conv1 row-parity group

    # ---- conv1: ONE matmul (kh folded into K) + fused W/H pool + bias + tanh
    xs = xs_ref[0]                                                  # (28*BT, 480)
    y = jnp.dot(xs, wb1_ref[...], preferred_element_type=jnp.float32)
    y = jnp.maximum(y[:, :h1], y[:, _LANE:_LANE + h1])              # W-pool (28*BT, 84)
    bc1 = bc1_ref[...]                                              # loaded once
    p1e = jnp.tanh(jnp.maximum(y[0 * g1:1 * g1], y[1 * g1:2 * g1]) + bc1)
    p1o = jnp.tanh(jnp.maximum(y[2 * g1:3 * g1], y[3 * g1:4 * g1]) + bc1)
    # p1e/p1o: (7*BT, 84); row = t*BT + b  -> pooled rows 2t / 2t+1 of image b.

    # ---- conv2: 5 kh-dots per output row-parity, batch stacked in M ---------
    bc2 = bc2_ref[...]
    y2 = []
    for rp in range(2):                           # 0: even output rows, 1: odd
        acc = None
        for kh in range(5):
            src = p1e if (rp + kh) % 2 == 0 else p1o
            d = (rp + kh) // 2
            t = jnp.dot(src[d * BT:(d + 5) * BT, :].astype(wb2_ref.dtype),
                        wb2_ref[kh], preferred_element_type=jnp.float32)
            acc = t if acc is None else acc + t                     # (5*BT, 256)
        y2.append(jnp.maximum(acc[:, :h2], acc[:, _LANE:_LANE + h2]))  # W-pool
    p2 = jnp.tanh(jnp.maximum(y2[0], y2[1]) + bc2)                  # (5*BT, 80)
    # p2 row = t2*BT + b (pooled conv2 row t2); col = pooled_w*16 + channel.

    # ---- classifier 400 -> 120 -> 84 -> 128(pad); batch stacked in M --------
    acc = None
    for h in range(5):
        t = jnp.dot(p2[h * BT:(h + 1) * BT, :].astype(w1_ref.dtype),
                    w1_ref[h], preferred_element_type=jnp.float32)  # (BT, 120)
        acc = t if acc is None else acc + t
    z = jnp.tanh(acc + b1_ref[...])
    z = jnp.tanh(jnp.dot(z, w2_ref[...],
                         preferred_element_type=jnp.float32) + b2_ref[...])
    o_ref[...] = jnp.dot(z, w3_ref[...],
                         preferred_element_type=jnp.float32) + b3_ref[...]


# --------------------------------- wrapper ----------------------------------

def lenet5_forward(prep, x_nchw, num_classes=10):
    """Fused LeNet-5 forward.  `prep` comes from prepare_params()."""
    B, C, H, W = x_nchw.shape
    assert H == 32 and W == 32, "LeNet-5 expects 32x32 spatial inputs"

    BT = min(B, 8)                       # images per grid step (<=8 keeps tiles small)
    while B % BT:
        BT -= 1
    NB = B // BT

    # h-only im2col slab (few hundred KB): rows ordered (parity group q, t, image)
    # so the kernel's fused H-pooling is a max of contiguous row blocks, and the
    # 5 kh taps are concatenated along K so conv1 becomes a single matmul.
    x = jnp.transpose(x_nchw, (0, 2, 3, 1)).reshape(B, H, W * C)
    rows = (np.arange(4)[:, None, None]            # q
            + 4 * np.arange(7)[None, :, None]      # t
            + np.arange(5)[None, None, :])         # kh   -> 4t + q + kh
    xs = x[:, rows, :]                                             # (B, 4, 7, 5, W*C)
    xs = xs.reshape(NB, BT, 4, 7, 5, W * C)
    xs = jnp.transpose(xs, (0, 2, 3, 1, 4, 5)).reshape(NB, 28 * BT, 5 * W * C)
    xs = xs.astype(prep["wb1"].dtype)

    args = (xs, prep["wb1"], prep["bc1"], prep["wb2"], prep["bc2"],
            prep["w1"], prep["b1"], prep["w2"], prep["b2"],
            prep["w3"], prep["b3"])

    def _const_spec(a):                  # weights: constant index_map -> VMEM resident
        return pl.BlockSpec(a.shape, lambda i, _n=a.ndim: (0,) * _n)

    in_specs = [pl.BlockSpec((1, 28 * BT, 5 * W * C), lambda i: (i, 0, 0))]
    in_specs += [_const_spec(a) for a in args[1:]]

    out = pl.pallas_call(
        _lenet5_kernel,
        out_shape=jax.ShapeDtypeStruct((B, _NC_PAD), jnp.float32),
        grid=(NB,),
        in_specs=in_specs,
        out_specs=pl.BlockSpec((BT, _NC_PAD), lambda i: (i, 0)),
        compiler_params=pltpu.CompilerParams(
            dimension_semantics=("parallel",)),       # batch tiles: both TCs on v7x
    )(*args)
    return out[:, :num_classes]


# ----------------------- one-time host-side weight prep ---------------------

def prepare_params(params, conv_dtype=jnp.float32):
    """Re-layout torch-style params into the kernel's formats (host, once).

    conv_dtype=jnp.bfloat16 gives native-MXU conv/fc1 operands on v6e/v7x.
    """

    def banded(w_oihw, w_in, w_out):
        # (Cout, Cin, 5, 5) -> (5, W_in*Cin, 256): per kh, map input col
        # (w*Cin + cin) to output cols; even output-w land in [0 : w_out/2*Cout],
        # odd output-w in [128 : 128 + w_out/2*Cout] (lane-aligned halves).
        w = np.asarray(w_oihw, np.float32)
        cout, cin, K, _ = w.shape
        wb = np.zeros((K, w_in * cin, 2 * _LANE), np.float32)
        for kh in range(K):
            for wo in range(w_out):
                c0 = (wo // 2) * cout + (_LANE if wo % 2 else 0)
                for kw in range(K):
                    wi = wo + kw
                    wb[kh, wi * cin:(wi + 1) * cin, c0:c0 + cout] = w[:, :, kh, kw].T
        return wb

    c1w = np.asarray(params["conv1_w"], np.float32)
    c2w = np.asarray(params["conv2_w"], np.float32)
    cin1, cout2 = c1w.shape[1], c2w.shape[0]

    # conv1: fold kh into the K (row) dimension -> one matmul in the kernel.
    wb1 = banded(c1w, 32, 28).reshape(5 * 32 * cin1, 2 * _LANE)     # (480, 256)
    wb2 = banded(c2w, 14, 10)                                       # (5, 84, 256)

    # fc1: torch flatten order is (c, h, w); kernel consumes (h, w*16+c, n).
    fc1 = np.asarray(params["fc1_w"], np.float32)                   # (120, 400)
    n1 = fc1.shape[0]
    w1 = fc1.reshape(n1, cout2, 5, 5).transpose(2, 3, 1, 0).reshape(5, 5 * cout2, n1)

    # fc3: zero-pad to 128 output columns (lane-dense single store).
    fc3 = np.asarray(params["fc3_w"], np.float32)                   # (nc, 84)
    nc = fc3.shape[0]
    w3 = np.zeros((fc3.shape[1], _NC_PAD), np.float32)
    w3[:, :nc] = fc3.T
    b3 = np.zeros((1, _NC_PAD), np.float32)
    b3[0, :nc] = np.asarray(params["fc3_b"], np.float32)

    return {
        "wb1": jnp.asarray(wb1, conv_dtype),
        "bc1": jnp.asarray(np.tile(np.asarray(params["conv1_b"], np.float32), 14)[None, :]),
        "wb2": jnp.asarray(wb2, conv_dtype),
        "bc2": jnp.asarray(np.tile(np.asarray(params["conv2_b"], np.float32), 5)[None, :]),
        "w1": jnp.asarray(w1, conv_dtype),
        "b1": jnp.asarray(np.asarray(params["fc1_b"], np.float32)[None, :]),
        "w2": jnp.asarray(np.asarray(params["fc2_w"], np.float32).T),
        "b2": jnp.asarray(np.asarray(params["fc2_b"], np.float32)[None, :]),
        "w3": jnp.asarray(w3),
        "b3": jnp.asarray(b3),
    }


# ------------------------ params & pure-JAX reference -----------------------

def init_params(key, in_features=3, num_classes=10):
    def uni(k, shape, fan_in):
        bound = 1.0 / math.sqrt(fan_in)
        return jax.random.uniform(k, shape, jnp.float32, -bound, bound)

    ks = jax.random.split(key, 10)
    return {
        "conv1_w": uni(ks[0], (6, in_features, 5, 5), in_features * 25),
        "conv1_b": uni(ks[1], (6,), in_features * 25),
        "conv2_w": uni(ks[2], (16, 6, 5, 5), 6 * 25),
        "conv2_b": uni(ks[3], (16,), 6 * 25),
        "fc1_w": uni(ks[4], (120, 16 * 5 * 5), 16 * 5 * 5),
        "fc1_b": uni(ks[5], (120,), 16 * 5 * 5),
        "fc2_w": uni(ks[6], (84, 120), 120),
        "fc2_b": uni(ks[7], (84,), 120),
        "fc3_w": uni(ks[8], (num_classes, 84), 84),
        "fc3_b": uni(ks[9], (num_classes,), 84),
    }


def reference_forward(params, x_nchw):
    dn = ("NCHW", "OIHW", "NCHW")
    hp = jax.lax.Precision.HIGHEST
    y = jax.lax.conv_general_dilated(x_nchw, params["conv1_w"], (1, 1), "VALID",
                                     dimension_numbers=dn, precision=hp)
    y = jnp.tanh(y + params["conv1_b"][None, :, None, None])
    y = jax.lax.reduce_window(y, -jnp.inf, jax.lax.max, (1, 1, 2, 2), (1, 1, 2, 2), "VALID")
    y = jax.lax.conv_general_dilated(y, params["conv2_w"], (1, 1), "VALID",
                                     dimension_numbers=dn, precision=hp)
    y = jnp.tanh(y + params["conv2_b"][None, :, None, None])
    y = jax.lax.reduce_window(y, -jnp.inf, jax.lax.max, (1, 1, 2, 2), (1, 1, 2, 2), "VALID")
    y = y.reshape(y.shape[0], -1)
    y = jnp.tanh(jnp.dot(y, params["fc1_w"].T, precision=hp) + params["fc1_b"])
    y = jnp.tanh(jnp.dot(y, params["fc2_w"].T, precision=hp) + params["fc2_b"])
    return jnp.dot(y, params["fc3_w"].T, precision=hp) + params["fc3_b"]


# ----------------------------------- main ------------------------------------

if __name__ == "__main__":
    key = jax.random.PRNGKey(0)
    pkey, xkey = jax.random.split(key)
    params = init_params(pkey, in_features=3, num_classes=10)
    prep = prepare_params(params)          # one-time host-side weight re-layout

    # LeNet-5 needs 32x32 spatial inputs for the 16*5*5 flatten.
    x = jax.random.normal(xkey, (2, 3, 32, 32), jnp.float32)

    fwd = jax.jit(lenet5_forward)
    out = jax.block_until_ready(fwd(prep, x))
    assert out.shape == (2, 10), out.shape

    ref = jax.block_until_ready(reference_forward(params, x))
    err = float(jnp.max(jnp.abs(out - ref)))
    assert jnp.allclose(out, ref, atol=1e-3, rtol=1e-3), f"max abs err {err}"

    print("KERNEL_OK")
</pallas_src>

<mosaic_0001>
module attributes {stable_mosaic.version = 11 : i64} {
  func.func @_lenet5_kernel(%arg0: i32, %arg1: memref<1x56x480xf32, #tpu.memory_space<vmem>>, %arg2: memref<480x256xf32, #tpu.memory_space<vmem>>, %arg3: memref<1x84xf32, #tpu.memory_space<vmem>>, %arg4: memref<5x84x256xf32, #tpu.memory_space<vmem>>, %arg5: memref<1x80xf32, #tpu.memory_space<vmem>>, %arg6: memref<5x80x120xf32, #tpu.memory_space<vmem>>, %arg7: memref<1x120xf32, #tpu.memory_space<vmem>>, %arg8: memref<120x84xf32, #tpu.memory_space<vmem>>, %arg9: memref<1x84xf32, #tpu.memory_space<vmem>>, %arg10: memref<84x128xf32, #tpu.memory_space<vmem>>, %arg11: memref<1x128xf32, #tpu.memory_space<vmem>>, %arg12: memref<2x128xf32, #tpu.memory_space<vmem>>) attributes {dimension_semantics = [#tpu.dimension_semantics<parallel>], iteration_bounds = array<i64: 1>, scalar_prefetch = 0 : i64, scratch_operands = 0 : i64, tpu.core_type = #tpu.core_type<tc>, window_params = [{transform_indices = @transform_0, window_bounds = array<i64: 1, 56, 480>}, {pipeline_mode = #tpu.pipeline_mode<synchronous>, transform_indices = @transform_1, window_bounds = array<i64: 480, 256>}, {pipeline_mode = #tpu.pipeline_mode<synchronous>, transform_indices = @transform_2, window_bounds = array<i64: 1, 84>}, {pipeline_mode = #tpu.pipeline_mode<synchronous>, transform_indices = @transform_3, window_bounds = array<i64: 5, 84, 256>}, {pipeline_mode = #tpu.pipeline_mode<synchronous>, transform_indices = @transform_4, window_bounds = array<i64: 1, 80>}, {pipeline_mode = #tpu.pipeline_mode<synchronous>, transform_indices = @transform_5, window_bounds = array<i64: 5, 80, 120>}, {pipeline_mode = #tpu.pipeline_mode<synchronous>, transform_indices = @transform_6, window_bounds = array<i64: 1, 120>}, {pipeline_mode = #tpu.pipeline_mode<synchronous>, transform_indices = @transform_7, window_bounds = array<i64: 120, 84>}, {pipeline_mode = #tpu.pipeline_mode<synchronous>, transform_indices = @transform_8, window_bounds = array<i64: 1, 84>}, {pipeline_mode = #tpu.pipeline_mode<synchronous>, transform_indices = @transform_9, window_bounds = array<i64: 84, 128>}, {pipeline_mode = #tpu.pipeline_mode<synchronous>, transform_indices = @transform_10, window_bounds = array<i64: 1, 128>}, {transform_indices = @transform_11, window_bounds = array<i64: 2, 128>}]} {
    %c0 = arith.constant 0 : index
    %c0_0 = arith.constant 0 : index
    %c0_1 = arith.constant 0 : index
    %0 = vector.load %arg1[%c0, %c0_0, %c0_1] : memref<1x56x480xf32, #tpu.memory_space<vmem>>, vector<1x56x480xf32>
    %1 = vector.shape_cast %0 : vector<1x56x480xf32> to vector<56x480xf32>
    %c0_2 = arith.constant 0 : index
    %c0_3 = arith.constant 0 : index
    %2 = vector.load %arg2[%c0_2, %c0_3] : memref<480x256xf32, #tpu.memory_space<vmem>>, vector<480x256xf32>
    %cst = arith.constant dense<0.000000e+00> : vector<56x256xf32>
    %3 = tpu.matmul %1, %2, %cst {dimension_numbers = #tpu.dot_dimension_numbers<[1], [0], [0], [1], [0, 0, 1, 1], [], []>} : vector<56x480xf32>, vector<480x256xf32>, vector<56x256xf32> -> vector<56x256xf32>
    %4 = vector.extract_strided_slice %3 {offsets = [0, 0], sizes = [56, 84], strides = [1, 1]} : vector<56x256xf32> to vector<56x84xf32>
    %5 = vector.extract_strided_slice %3 {offsets = [0, 128], sizes = [56, 84], strides = [1, 1]} : vector<56x256xf32> to vector<56x84xf32>
    %6 = arith.maximumf %4, %5 : vector<56x84xf32>
    %c0_4 = arith.constant 0 : index
    %c0_5 = arith.constant 0 : index
    %7 = vector.load %arg3[%c0_4, %c0_5] : memref<1x84xf32, #tpu.memory_space<vmem>>, vector<1x84xf32>
    %8 = vector.extract_strided_slice %6 {offsets = [0, 0], sizes = [14, 84], strides = [1, 1]} : vector<56x84xf32> to vector<14x84xf32>
    %9 = vector.extract_strided_slice %6 {offsets = [14, 0], sizes = [14, 84], strides = [1, 1]} : vector<56x84xf32> to vector<14x84xf32>
    %10 = arith.maximumf %8, %9 : vector<14x84xf32>
    %11 = vector.broadcast %7 : vector<1x84xf32> to vector<14x84xf32>
    %12 = arith.addf %10, %11 : vector<14x84xf32>
    %13 = math.tanh %12 : vector<14x84xf32>
    %14 = vector.extract_strided_slice %6 {offsets = [28, 0], sizes = [14, 84], strides = [1, 1]} : vector<56x84xf32> to vector<14x84xf32>
    %15 = vector.extract_strided_slice %6 {offsets = [42, 0], sizes = [14, 84], strides = [1, 1]} : vector<56x84xf32> to vector<14x84xf32>
    %16 = arith.maximumf %14, %15 : vector<14x84xf32>
    %17 = vector.broadcast %7 : vector<1x84xf32> to vector<14x84xf32>
    %18 = arith.addf %16, %17 : vector<14x84xf32>
    %19 = math.tanh %18 : vector<14x84xf32>
    %c0_6 = arith.constant 0 : index
    %c0_7 = arith.constant 0 : index
    %20 = vector.load %arg5[%c0_6, %c0_7] : memref<1x80xf32, #tpu.memory_space<vmem>>, vector<1x80xf32>
    %21 = vector.extract_strided_slice %13 {offsets = [0, 0], sizes = [10, 84], strides = [1, 1]} : vector<14x84xf32> to vector<10x84xf32>
    %c0_8 = arith.constant 0 : index
    %c0_9 = arith.constant 0 : index
    %c0_10 = arith.constant 0 : index
    %22 = vector.load %arg4[%c0_8, %c0_9, %c0_10] : memref<5x84x256xf32, #tpu.memory_space<vmem>>, vector<1x84x256xf32>
    %23 = vector.shape_cast %22 : vector<1x84x256xf32> to vector<84x256xf32>
    %cst_11 = arith.constant dense<0.000000e+00> : vector<10x256xf32>
    %24 = tpu.matmul %21, %23, %cst_11 {dimension_numbers = #tpu.dot_dimension_numbers<[1], [0], [0], [1], [0, 0, 1, 1], [], []>} : vector<10x84xf32>, vector<84x256xf32>, vector<10x256xf32> -> vector<10x256xf32>
    %25 = vector.extract_strided_slice %19 {offsets = [0, 0], sizes = [10, 84], strides = [1, 1]} : vector<14x84xf32> to vector<10x84xf32>
    %c1 = arith.constant 1 : index
    %c0_12 = arith.constant 0 : index
    %c0_13 = arith.constant 0 : index
    %26 = vector.load %arg4[%c1, %c0_12, %c0_13] : memref<5x84x256xf32, #tpu.memory_space<vmem>>, vector<1x84x256xf32>
    %27 = vector.shape_cast %26 : vector<1x84x256xf32> to vector<84x256xf32>
    %cst_14 = arith.constant dense<0.000000e+00> : vector<10x256xf32>
    %28 = tpu.matmul %25, %27, %cst_14 {dimension_numbers = #tpu.dot_dimension_numbers<[1], [0], [0], [1], [0, 0, 1, 1], [], []>} : vector<10x84xf32>, vector<84x256xf32>, vector<10x256xf32> -> vector<10x256xf32>
    %29 = arith.addf %24, %28 : vector<10x256xf32>
    %30 = vector.extract_strided_slice %13 {offsets = [2, 0], sizes = [10, 84], strides = [1, 1]} : vector<14x84xf32> to vector<10x84xf32>
    %c2 = arith.constant 2 : index
    %c0_15 = arith.constant 0 : index
    %c0_16 = arith.constant 0 : index
    %31 = vector.load %arg4[%c2, %c0_15, %c0_16] : memref<5x84x256xf32, #tpu.memory_space<vmem>>, vector<1x84x256xf32>
    %32 = vector.shape_cast %31 : vector<1x84x256xf32> to vector<84x256xf32>
    %cst_17 = arith.constant dense<0.000000e+00> : vector<10x256xf32>
    %33 = tpu.matmul %30, %32, %cst_17 {dimension_numbers = #tpu.dot_dimension_numbers<[1], [0], [0], [1], [0, 0, 1, 1], [], []>} : vector<10x84xf32>, vector<84x256xf32>, vector<10x256xf32> -> vector<10x256xf32>
    %34 = arith.addf %29, %33 : vector<10x256xf32>
    %35 = vector.extract_strided_slice %19 {offsets = [2, 0], sizes = [10, 84], strides = [1, 1]} : vector<14x84xf32> to vector<10x84xf32>
    %c3 = arith.constant 3 : index
    %c0_18 = arith.constant 0 : index
    %c0_19 = arith.constant 0 : index
    %36 = vector.load %arg4[%c3, %c0_18, %c0_19] : memref<5x84x256xf32, #tpu.memory_space<vmem>>, vector<1x84x256xf32>
    %37 = vector.shape_cast %36 : vector<1x84x256xf32> to vector<84x256xf32>
    %cst_20 = arith.constant dense<0.000000e+00> : vector<10x256xf32>
    %38 = tpu.matmul %35, %37, %cst_20 {dimension_numbers = #tpu.dot_dimension_numbers<[1], [0], [0], [1], [0, 0, 1, 1], [], []>} : vector<10x84xf32>, vector<84x256xf32>, vector<10x256xf32> -> vector<10x256xf32>
    %39 = arith.addf %34, %38 : vector<10x256xf32>
    %40 = vector.extract_strided_slice %13 {offsets = [4, 0], sizes = [10, 84], strides = [1, 1]} : vector<14x84xf32> to vector<10x84xf32>
    %c4 = arith.constant 4 : index
    %c0_21 = arith.constant 0 : index
    %c0_22 = arith.constant 0 : index
    %41 = vector.load %arg4[%c4, %c0_21, %c0_22] : memref<5x84x256xf32, #tpu.memory_space<vmem>>, vector<1x84x256xf32>
    %42 = vector.shape_cast %41 : vector<1x84x256xf32> to vector<84x256xf32>
    %cst_23 = arith.constant dense<0.000000e+00> : vector<10x256xf32>
    %43 = tpu.matmul %40, %42, %cst_23 {dimension_numbers = #tpu.dot_dimension_numbers<[1], [0], [0], [1], [0, 0, 1, 1], [], []>} : vector<10x84xf32>, vector<84x256xf32>, vector<10x256xf32> -> vector<10x256xf32>
    %44 = arith.addf %39, %43 : vector<10x256xf32>
    %45 = vector.extract_strided_slice %44 {offsets = [0, 0], sizes = [10, 80], strides = [1, 1]} : vector<10x256xf32> to vector<10x80xf32>
    %46 = vector.extract_strided_slice %44 {offsets = [0, 128], sizes = [10, 80], strides = [1, 1]} : vector<10x256xf32> to vector<10x80xf32>
    %47 = arith.maximumf %45, %46 : vector<10x80xf32>
    %48 = vector.extract_strided_slice %19 {offsets = [0, 0], sizes = [10, 84], strides = [1, 1]} : vector<14x84xf32> to vector<10x84xf32>
    %c0_24 = arith.constant 0 : index
    %c0_25 = arith.constant 0 : index
    %c0_26 = arith.constant 0 : index
    %49 = vector.load %arg4[%c0_24, %c0_25, %c0_26] : memref<5x84x256xf32, #tpu.memory_space<vmem>>, vector<1x84x256xf32>
    %50 = vector.shape_cast %49 : vector<1x84x256xf32> to vector<84x256xf32>
    %cst_27 = arith.constant dense<0.000000e+00> : vector<10x256xf32>
    %51 = tpu.matmul %48, %50, %cst_27 {dimension_numbers = #tpu.dot_dimension_numbers<[1], [0], [0], [1], [0, 0, 1, 1], [], []>} : vector<10x84xf32>, vector<84x256xf32>, vector<10x256xf32> -> vector<10x256xf32>
    %52 = vector.extract_strided_slice %13 {offsets = [2, 0], sizes = [10, 84], strides = [1, 1]} : vector<14x84xf32> to vector<10x84xf32>
    %c1_28 = arith.constant 1 : index
    %c0_29 = arith.constant 0 : index
    %c0_30 = arith.constant 0 : index
    %53 = vector.load %arg4[%c1_28, %c0_29, %c0_30] : memref<5x84x256xf32, #tpu.memory_space<vmem>>, vector<1x84x256xf32>
    %54 = vector.shape_cast %53 : vector<1x84x256xf32> to vector<84x256xf32>
    %cst_31 = arith.constant dense<0.000000e+00> : vector<10x256xf32>
    %55 = tpu.matmul %52, %54, %cst_31 {dimension_numbers = #tpu.dot_dimension_numbers<[1], [0], [0], [1], [0, 0, 1, 1], [], []>} : vector<10x84xf32>, vector<84x256xf32>, vector<10x256xf32> -> vector<10x256xf32>
    %56 = arith.addf %51, %55 : vector<10x256xf32>
    %57 = vector.extract_strided_slice %19 {offsets = [2, 0], sizes = [10, 84], strides = [1, 1]} : vector<14x84xf32> to vector<10x84xf32>
    %c2_32 = arith.constant 2 : index
    %c0_33 = arith.constant 0 : index
    %c0_34 = arith.constant 0 : index
    %58 = vector.load %arg4[%c2_32, %c0_33, %c0_34] : memref<5x84x256xf32, #tpu.memory_space<vmem>>, vector<1x84x256xf32>
    %59 = vector.shape_cast %58 : vector<1x84x256xf32> to vector<84x256xf32>
    %cst_35 = arith.constant dense<0.000000e+00> : vector<10x256xf32>
    %60 = tpu.matmul %57, %59, %cst_35 {dimension_numbers = #tpu.dot_dimension_numbers<[1], [0], [0], [1], [0, 0, 1, 1], [], []>} : vector<10x84xf32>, vector<84x256xf32>, vector<10x256xf32> -> vector<10x256xf32>
    %61 = arith.addf %56, %60 : vector<10x256xf32>
    %62 = vector.extract_strided_slice %13 {offsets = [4, 0], sizes = [10, 84], strides = [1, 1]} : vector<14x84xf32> to vector<10x84xf32>
    %c3_36 = arith.constant 3 : index
    %c0_37 = arith.constant 0 : index
    %c0_38 = arith.constant 0 : index
    %63 = vector.load %arg4[%c3_36, %c0_37, %c0_38] : memref<5x84x256xf32, #tpu.memory_space<vmem>>, vector<1x84x256xf32>
    %64 = vector.shape_cast %63 : vector<1x84x256xf32> to vector<84x256xf32>
    %cst_39 = arith.constant dense<0.000000e+00> : vector<10x256xf32>
    %65 = tpu.matmul %62, %64, %cst_39 {dimension_numbers = #tpu.dot_dimension_numbers<[1], [0], [0], [1], [0, 0, 1, 1], [], []>} : vector<10x84xf32>, vector<84x256xf32>, vector<10x256xf32> -> vector<10x256xf32>
    %66 = arith.addf %61, %65 : vector<10x256xf32>
    %67 = vector.extract_strided_slice %19 {offsets = [4, 0], sizes = [10, 84], strides = [1, 1]} : vector<14x84xf32> to vector<10x84xf32>
    %c4_40 = arith.constant 4 : index
    %c0_41 = arith.constant 0 : index
    %c0_42 = arith.constant 0 : index
    %68 = vector.load %arg4[%c4_40, %c0_41, %c0_42] : memref<5x84x256xf32, #tpu.memory_space<vmem>>, vector<1x84x256xf32>
    %69 = vector.shape_cast %68 : vector<1x84x256xf32> to vector<84x256xf32>
    %cst_43 = arith.constant dense<0.000000e+00> : vector<10x256xf32>
    %70 = tpu.matmul %67, %69, %cst_43 {dimension_numbers = #tpu.dot_dimension_numbers<[1], [0], [0], [1], [0, 0, 1, 1], [], []>} : vector<10x84xf32>, vector<84x256xf32>, vector<10x256xf32> -> vector<10x256xf32>
    %71 = arith.addf %66, %70 : vector<10x256xf32>
    %72 = vector.extract_strided_slice %71 {offsets = [0, 0], sizes = [10, 80], strides = [1, 1]} : vector<10x256xf32> to vector<10x80xf32>
    %73 = vector.extract_strided_slice %71 {offsets = [0, 128], sizes = [10, 80], strides = [1, 1]} : vector<10x256xf32> to vector<10x80xf32>
    %74 = arith.maximumf %72, %73 : vector<10x80xf32>
    %75 = arith.maximumf %47, %74 : vector<10x80xf32>
    %76 = vector.broadcast %20 : vector<1x80xf32> to vector<10x80xf32>
    %77 = arith.addf %75, %76 : vector<10x80xf32>
    %78 = math.tanh %77 : vector<10x80xf32>
    %79 = vector.extract_strided_slice %78 {offsets = [0, 0], sizes = [2, 80], strides = [1, 1]} : vector<10x80xf32> to vector<2x80xf32>
    %c0_44 = arith.constant 0 : index
    %c0_45 = arith.constant 0 : index
    %c0_46 = arith.constant 0 : index
    %80 = vector.load %arg6[%c0_44, %c0_45, %c0_46] : memref<5x80x120xf32, #tpu.memory_space<vmem>>, vector<1x80x120xf32>
    %81 = vector.shape_cast %80 : vector<1x80x120xf32> to vector<80x120xf32>
    %cst_47 = arith.constant dense<0.000000e+00> : vector<2x120xf32>
    %82 = tpu.matmul %79, %81, %cst_47 {dimension_numbers = #tpu.dot_dimension_numbers<[1], [0], [0], [1], [0, 0, 1, 1], [], []>} : vector<2x80xf32>, vector<80x120xf32>, vector<2x120xf32> -> vector<2x120xf32>
    %83 = vector.extract_strided_slice %78 {offsets = [2, 0], sizes = [2, 80], strides = [1, 1]} : vector<10x80xf32> to vector<2x80xf32>
    %c1_48 = arith.constant 1 : index
    %c0_49 = arith.constant 0 : index
    %c0_50 = arith.constant 0 : index
    %84 = vector.load %arg6[%c1_48, %c0_49, %c0_50] : memref<5x80x120xf32, #tpu.memory_space<vmem>>, vector<1x80x120xf32>
    %85 = vector.shape_cast %84 : vector<1x80x120xf32> to vector<80x120xf32>
    %cst_51 = arith.constant dense<0.000000e+00> : vector<2x120xf32>
    %86 = tpu.matmul %83, %85, %cst_51 {dimension_numbers = #tpu.dot_dimension_numbers<[1], [0], [0], [1], [0, 0, 1, 1], [], []>} : vector<2x80xf32>, vector<80x120xf32>, vector<2x120xf32> -> vector<2x120xf32>
    %87 = arith.addf %82, %86 : vector<2x120xf32>
    %88 = vector.extract_strided_slice %78 {offsets = [4, 0], sizes = [2, 80], strides = [1, 1]} : vector<10x80xf32> to vector<2x80xf32>
    %c2_52 = arith.constant 2 : index
    %c0_53 = arith.constant 0 : index
    %c0_54 = arith.constant 0 : index
    %89 = vector.load %arg6[%c2_52, %c0_53, %c0_54] : memref<5x80x120xf32, #tpu.memory_space<vmem>>, vector<1x80x120xf32>
    %90 = vector.shape_cast %89 : vector<1x80x120xf32> to vector<80x120xf32>
    %cst_55 = arith.constant dense<0.000000e+00> : vector<2x120xf32>
    %91 = tpu.matmul %88, %90, %cst_55 {dimension_numbers = #tpu.dot_dimension_numbers<[1], [0], [0], [1], [0, 0, 1, 1], [], []>} : vector<2x80xf32>, vector<80x120xf32>, vector<2x120xf32> -> vector<2x120xf32>
    %92 = arith.addf %87, %91 : vector<2x120xf32>
    %93 = vector.extract_strided_slice %78 {offsets = [6, 0], sizes = [2, 80], strides = [1, 1]} : vector<10x80xf32> to vector<2x80xf32>
    %c3_56 = arith.constant 3 : index
    %c0_57 = arith.constant 0 : index
    %c0_58 = arith.constant 0 : index
    %94 = vector.load %arg6[%c3_56, %c0_57, %c0_58] : memref<5x80x120xf32, #tpu.memory_space<vmem>>, vector<1x80x120xf32>
    %95 = vector.shape_cast %94 : vector<1x80x120xf32> to vector<80x120xf32>
    %cst_59 = arith.constant dense<0.000000e+00> : vector<2x120xf32>
    %96 = tpu.matmul %93, %95, %cst_59 {dimension_numbers = #tpu.dot_dimension_numbers<[1], [0], [0], [1], [0, 0, 1, 1], [], []>} : vector<2x80xf32>, vector<80x120xf32>, vector<2x120xf32> -> vector<2x120xf32>
    %97 = arith.addf %92, %96 : vector<2x120xf32>
    %98 = vector.extract_strided_slice %78 {offsets = [8, 0], sizes = [2, 80], strides = [1, 1]} : vector<10x80xf32> to vector<2x80xf32>
    %c4_60 = arith.constant 4 : index
    %c0_61 = arith.constant 0 : index
    %c0_62 = arith.constant 0 : index
    %99 = vector.load %arg6[%c4_60, %c0_61, %c0_62] : memref<5x80x120xf32, #tpu.memory_space<vmem>>, vector<1x80x120xf32>
    %100 = vector.shape_cast %99 : vector<1x80x120xf32> to vector<80x120xf32>
    %cst_63 = arith.constant dense<0.000000e+00> : vector<2x120xf32>
    %101 = tpu.matmul %98, %100, %cst_63 {dimension_numbers = #tpu.dot_dimension_numbers<[1], [0], [0], [1], [0, 0, 1, 1], [], []>} : vector<2x80xf32>, vector<80x120xf32>, vector<2x120xf32> -> vector<2x120xf32>
    %102 = arith.addf %97, %101 : vector<2x120xf32>
    %c0_64 = arith.constant 0 : index
    %c0_65 = arith.constant 0 : index
    %103 = vector.load %arg7[%c0_64, %c0_65] : memref<1x120xf32, #tpu.memory_space<vmem>>, vector<1x120xf32>
    %104 = vector.broadcast %103 : vector<1x120xf32> to vector<2x120xf32>
    %105 = arith.addf %102, %104 : vector<2x120xf32>
    %106 = math.tanh %105 : vector<2x120xf32>
    %c0_66 = arith.constant 0 : index
    %c0_67 = arith.constant 0 : index
    %107 = vector.load %arg8[%c0_66, %c0_67] : memref<120x84xf32, #tpu.memory_space<vmem>>, vector<120x84xf32>
    %cst_68 = arith.constant dense<0.000000e+00> : vector<2x84xf32>
    %108 = tpu.matmul %106, %107, %cst_68 {dimension_numbers = #tpu.dot_dimension_numbers<[1], [0], [0], [1], [0, 0, 1, 1], [], []>} : vector<2x120xf32>, vector<120x84xf32>, vector<2x84xf32> -> vector<2x84xf32>
    %c0_69 = arith.constant 0 : index
    %c0_70 = arith.constant 0 : index
    %109 = vector.load %arg9[%c0_69, %c0_70] : memref<1x84xf32, #tpu.memory_space<vmem>>, vector<1x84xf32>
    %110 = vector.broadcast %109 : vector<1x84xf32> to vector<2x84xf32>
    %111 = arith.addf %108, %110 : vector<2x84xf32>
    %112 = math.tanh %111 : vector<2x84xf32>
    %c0_71 = arith.constant 0 : index
    %c0_72 = arith.constant 0 : index
    %113 = vector.load %arg10[%c0_71, %c0_72] : memref<84x128xf32, #tpu.memory_space<vmem>>, vector<84x128xf32>
    %cst_73 = arith.constant dense<0.000000e+00> : vector<2x128xf32>
    %114 = tpu.matmul %112, %113, %cst_73 {dimension_numbers = #tpu.dot_dimension_numbers<[1], [0], [0], [1], [0, 0, 1, 1], [], []>} : vector<2x84xf32>, vector<84x128xf32>, vector<2x128xf32> -> vector<2x128xf32>
    %c0_74 = arith.constant 0 : index
    %c0_75 = arith.constant 0 : index
    %115 = vector.load %arg11[%c0_74, %c0_75] : memref<1x128xf32, #tpu.memory_space<vmem>>, vector<1x128xf32>
    %116 = vector.broadcast %115 : vector<1x128xf32> to vector<2x128xf32>
    %117 = arith.addf %114, %116 : vector<2x128xf32>
    %c0_76 = arith.constant 0 : index
    %c0_77 = arith.constant 0 : index
    %118 = vector.load %arg12[%c0_76, %c0_77] : memref<2x128xf32, #tpu.memory_space<vmem>>, vector<2x128xf32>
    tpu.vector_store %arg12[%c0_76, %c0_77], %117 {strides = array<i32>} : memref<2x128xf32, #tpu.memory_space<vmem>>, vector<2x128xf32>,
    return
  }
  func.func @transform_0(%arg0: i32) -> (i32, i32, i32) {
    %c0_i32 = arith.constant 0 : i32
    %c0_i32_0 = arith.constant 0 : i32
    %c0_i32_1 = arith.constant 0 : i32
    return %arg0, %c0_i32, %c0_i32_0 : i32, i32, i32
  }
  func.func @transform_1(%arg0: i32) -> (i32, i32) {
    %c0_i32 = arith.constant 0 : i32
    %c0_i32_0 = arith.constant 0 : i32
    %c0_i32_1 = arith.constant 0 : i32
    return %c0_i32, %c0_i32_0 : i32, i32
  }
  func.func @transform_2(%arg0: i32) -> (i32, i32) {
    %c0_i32 = arith.constant 0 : i32
    %c0_i32_0 = arith.constant 0 : i32
    %c0_i32_1 = arith.constant 0 : i32
    return %c0_i32, %c0_i32_0 : i32, i32
  }
  func.func @transform_3(%arg0: i32) -> (i32, i32, i32) {
    %c0_i32 = arith.constant 0 : i32
    %c0_i32_0 = arith.constant 0 : i32
    %c0_i32_1 = arith.constant 0 : i32
    %c0_i32_2 = arith.constant 0 : i32
    return %c0_i32, %c0_i32_0, %c0_i32_1 : i32, i32, i32
  }
  func.func @transform_4(%arg0: i32) -> (i32, i32) {
    %c0_i32 = arith.constant 0 : i32
    %c0_i32_0 = arith.constant 0 : i32
    %c0_i32_1 = arith.constant 0 : i32
    return %c0_i32, %c0_i32_0 : i32, i32
  }
  func.func @transform_5(%arg0: i32) -> (i32, i32, i32) {
    %c0_i32 = arith.constant 0 : i32
    %c0_i32_0 = arith.constant 0 : i32
    %c0_i32_1 = arith.constant 0 : i32
    %c0_i32_2 = arith.constant 0 : i32
    return %c0_i32, %c0_i32_0, %c0_i32_1 : i32, i32, i32
  }
  func.func @transform_6(%arg0: i32) -> (i32, i32) {
    %c0_i32 = arith.constant 0 : i32
    %c0_i32_0 = arith.constant 0 : i32
    %c0_i32_1 = arith.constant 0 : i32
    return %c0_i32, %c0_i32_0 : i32, i32
  }
  func.func @transform_7(%arg0: i32) -> (i32, i32) {
    %c0_i32 = arith.constant 0 : i32
    %c0_i32_0 = arith.constant 0 : i32
    %c0_i32_1 = arith.constant 0 : i32
    return %c0_i32, %c0_i32_0 : i32, i32
  }
  func.func @transform_8(%arg0: i32) -> (i32, i32) {
    %c0_i32 = arith.constant 0 : i32
    %c0_i32_0 = arith.constant 0 : i32
    %c0_i32_1 = arith.constant 0 : i32
    return %c0_i32, %c0_i32_0 : i32, i32
  }
  func.func @transform_9(%arg0: i32) -> (i32, i32) {
    %c0_i32 = arith.constant 0 : i32
    %c0_i32_0 = arith.constant 0 : i32
    %c0_i32_1 = arith.constant 0 : i32
    return %c0_i32, %c0_i32_0 : i32, i32
  }
  func.func @transform_10(%arg0: i32) -> (i32, i32) {
    %c0_i32 = arith.constant 0 : i32
    %c0_i32_0 = arith.constant 0 : i32
    %c0_i32_1 = arith.constant 0 : i32
    return %c0_i32, %c0_i32_0 : i32, i32
  }
  func.func @transform_11(%arg0: i32) -> (i32, i32) {
    %c0_i32 = arith.constant 0 : i32
    %c0_i32_0 = arith.constant 0 : i32
    return %arg0, %c0_i32 : i32, i32
  }
}

</mosaic_0001>

<llo_original>
// kernel: lenet5_forward.1
$region0: #{lenet5_forward.1}
  #allocation0 [shape = 'u32[]', space=smem, size = 0x4, offset = 0x4, fixed_abs, tag = 'smem constant byte address 0x4 - core index']
  #allocation1 [shape = 'u32[144,128]{1,0:T(1,128)}', space=vmem, size = 0x12000, scoped, tag = 'internal scratch']
  %s0 = inlined_call_operand.vmem [shape: f32[1,56,480], index: 0, kind: input, shape index: {}]
  %s1 = inlined_call_operand.vmem [shape: f32[480,256], index: 1, kind: input, shape index: {}]
  %s2 = inlined_call_operand.vmem [shape: f32[1,84], index: 2, kind: input, shape index: {}]
  %s3 = inlined_call_operand.vmem [shape: f32[5,84,256], index: 3, kind: input, shape index: {}]
  %s4 = inlined_call_operand.vmem [shape: f32[1,80], index: 4, kind: input, shape index: {}]
  %s5 = inlined_call_operand.vmem [shape: f32[5,80,120], index: 5, kind: input, shape index: {}]
  %s6 = inlined_call_operand.vmem [shape: f32[1,120], index: 6, kind: input, shape index: {}]
  %s7 = inlined_call_operand.vmem [shape: f32[120,84], index: 7, kind: input, shape index: {}]
  %s8 = inlined_call_operand.vmem [shape: f32[1,84], index: 8, kind: input, shape index: {}]
  %s9 = inlined_call_operand.vmem [shape: f32[84,128], index: 9, kind: input, shape index: {}]
  %s10 = inlined_call_operand.vmem [shape: f32[1,128], index: 10, kind: input, shape index: {}]
  %s11 = inlined_call_operand.hbm [shape: f32[2,128], index: 11, kind: output, shape index: {}]
  %s12 = sld [smem:[#allocation0]]
  $region54: #{lenet5_forward.1} parent=0
    _
  %s14 = ssub.s32 1, %s12
  %s15 = scalar_select 0, %s14, %s12
  $region1: #{lenet5_forward.1} parent=0
    #allocation2 [shape = 'u8[1024]{0}', space=vmem, size = 0x400, scoped, tag = 'output window, operand 0, single buffered']
    #allocation3 [shape = 's32[1]{0}', space=sflag, size = 0x4, scoped, tag = 'scoped memory for lenet5_forward.1']
    %16 = vsyncpa [#allocation3], 0
    // Predicated region
    $region2: #{lenet5_forward.1} parent=1 // pred_check
      _
    $region3: #{lenet5_forward.1} parent=1 // pred_check_branch
      %18 = sbr.rel (0) target = $region5
    $region4: #{lenet5_forward.1} parent=1 // pred_region
      _
    $region5: #{lenet5_forward.1} parent=1 // pred_fallthru
      _
    // Predicated region
    $region6: #{lenet5_forward.1} parent=1 // pred_check
      _
    $region7: #{lenet5_forward.1} parent=1 // pred_check_branch
      %20 = sbr.rel (0) target = $region9
    $region8: #{lenet5_forward.1} parent=1 // pred_region
      _
    $region9: #{lenet5_forward.1} parent=1 // pred_fallthru
      _
    // Predicated region
    $region10: #{lenet5_forward.1} parent=1 // pred_check
      _
    $region11: #{lenet5_forward.1} parent=1 // pred_check_branch
      %22 = sbr.rel (0) target = $region13
    $region12: #{lenet5_forward.1} parent=1 // pred_region
      _
    $region13: #{lenet5_forward.1} parent=1 // pred_fallthru
      _
    // Predicated region
    $region14: #{lenet5_forward.1} parent=1 // pred_check
      _
    $region15: #{lenet5_forward.1} parent=1 // pred_check_branch
      %24 = sbr.rel (0) target = $region17
    $region16: #{lenet5_forward.1} parent=1 // pred_region
      _
    $region17: #{lenet5_forward.1} parent=1 // pred_fallthru
      _
    // Predicated region
    $region18: #{lenet5_forward.1} parent=1 // pred_check
      _
    $region19: #{lenet5_forward.1} parent=1 // pred_check_branch
      %26 = sbr.rel (0) target = $region21
    $region20: #{lenet5_forward.1} parent=1 // pred_region
      _
    $region21: #{lenet5_forward.1} parent=1 // pred_fallthru
      _
    // Predicated region
    $region22: #{lenet5_forward.1} parent=1 // pred_check
      _
    $region23: #{lenet5_forward.1} parent=1 // pred_check_branch
      %28 = sbr.rel (0) target = $region25
    $region24: #{lenet5_forward.1} parent=1 // pred_region
      _
    $region25: #{lenet5_forward.1} parent=1 // pred_fallthru
      _
    // Predicated region
    $region26: #{lenet5_forward.1} parent=1 // pred_check
      _
    $region27: #{lenet5_forward.1} parent=1 // pred_check_branch
      %30 = sbr.rel (0) target = $region29
    $region28: #{lenet5_forward.1} parent=1 // pred_region
      _
    $region29: #{lenet5_forward.1} parent=1 // pred_fallthru
      _
    // Predicated region
    $region30: #{lenet5_forward.1} parent=1 // pred_check
      _
    $region31: #{lenet5_forward.1} parent=1 // pred_check_branch
      %32 = sbr.rel (0) target = $region33
    $region32: #{lenet5_forward.1} parent=1 // pred_region
      _
    $region33: #{lenet5_forward.1} parent=1 // pred_fallthru
      _
    // Predicated region
    $region34: #{lenet5_forward.1} parent=1 // pred_check
      _
    $region35: #{lenet5_forward.1} parent=1 // pred_check_branch
      %34 = sbr.rel (0) target = $region37
    $region36: #{lenet5_forward.1} parent=1 // pred_region
      _
    $region37: #{lenet5_forward.1} parent=1 // pred_fallthru
      _
    // Predicated region
    $region38: #{lenet5_forward.1} parent=1 // pred_check
      _
    $region39: #{lenet5_forward.1} parent=1 // pred_check_branch
      %36 = sbr.rel (0) target = $region41
    $region40: #{lenet5_forward.1} parent=1 // pred_region
      _
    $region41: #{lenet5_forward.1} parent=1 // pred_fallthru
      _
    // Predicated region
    $region42: #{lenet5_forward.1} parent=1 // pred_check
      _
    $region43: #{lenet5_forward.1} parent=1 // pred_check_branch
      %38 = sbr.rel (0) target = $region45
    $region44: #{lenet5_forward.1} parent=1 // pred_region
      _
    $region45: #{lenet5_forward.1} parent=1 // pred_fallthru
      _
    %v39 = vld [vmem:[%s0] sm:$0xff]
    %v40 = vld [vmem:[%s0 + $0x8] sm:$0xff]
    %v41 = vld [vmem:[%s0 + $0x10] sm:$0xff]
    %v42 = vld [vmem:[%s0 + $0x18] sm:$0xff]
    %v43 = vld [vmem:[%s0 + $0x20] sm:$0xff]
    %v44 = vld [vmem:[%s0 + $0x28] sm:$0xff]
    %v45 = vld [vmem:[%s0 + $0x30] sm:$0xff]
    %v46 = vld [vmem:[%s0 + $0x38] sm:$0xff]
    %v47 = vld [vmem:[%s0 + $0x40] sm:$0xff]
    %v48 = vld [vmem:[%s0 + $0x48] sm:$0xff]
    %v49 = vld [vmem:[%s0 + $0x50] sm:$0xff]
    %v50 = vld [vmem:[%s0 + $0x58] sm:$0xff]
    %v51 = vld [vmem:[%s0 + $0x60] sm:$0xff]
    %v52 = vld [vmem:[%s0 + $0x68] sm:$0xff]
    %v53 = vld [vmem:[%s0 + $0x70] sm:$0xff]
    %v54 = vld [vmem:[%s0 + $0x78] sm:$0xff]
    %v55 = vld [vmem:[%s0 + $0x80] sm:$0xff]
    %v56 = vld [vmem:[%s0 + $0x88] sm:$0xff]
    %v57 = vld [vmem:[%s0 + $0x90] sm:$0xff]
    %v58 = vld [vmem:[%s0 + $0x98] sm:$0xff]
    %v59 = vld [vmem:[%s0 + $0xa0] sm:$0xff]
    %v60 = vld [vmem:[%s0 + $0xa8] sm:$0xff]
    %v61 = vld [vmem:[%s0 + $0xb0] sm:$0xff]
    %v62 = vld [vmem:[%s0 + $0xb8] sm:$0xff]
    %v63 = vld [vmem:[%s0 + $0xc0] sm:$0xff]
    %v64 = vld [vmem:[%s0 + $0xc8] sm:$0xff]
    %v65 = vld [vmem:[%s0 + $0xd0] sm:$0xff]
    %v66 = vld [vmem:[%s0 + $0xd8] sm:$0xff]
    %v67 = vld [vmem:[%s1] sm:$0xff]
    %v68 = vld [vmem:[%s1 + $0x8] sm:$0xff]
    %v69 = vld [vmem:[%s1 + $0x10] sm:$0xff]
    %v70 = vld [vmem:[%s1 + $0x18] sm:$0xff]
    %v71 = vld [vmem:[%s1 + $0x20] sm:$0xff]
    %v72 = vld [vmem:[%s1 + $0x28] sm:$0xff]
    %v73 = vld [vmem:[%s1 + $0x30] sm:$0xff]
    %v74 = vld [vmem:[%s1 + $0x38] sm:$0xff]
    %v75 = vld [vmem:[%s1 + $0x40] sm:$0xff]
    %v76 = vld [vmem:[%s1 + $0x48] sm:$0xff]
    %v77 = vld [vmem:[%s1 + $0x50] sm:$0xff]
    %v78 = vld [vmem:[%s1 + $0x58] sm:$0xff]
    %v79 = vld [vmem:[%s1 + $0x60] sm:$0xff]
    %v80 = vld [vmem:[%s1 + $0x68] sm:$0xff]
    %v81 = vld [vmem:[%s1 + $0x70] sm:$0xff]
    %v82 = vld [vmem:[%s1 + $0x78] sm:$0xff]
    %v83 = vld [vmem:[%s1 + $0x80] sm:$0xff]
    %v84 = vld [vmem:[%s1 + $0x88] sm:$0xff]
    %v85 = vld [vmem:[%s1 + $0x90] sm:$0xff]
    %v86 = vld [vmem:[%s1 + $0x98] sm:$0xff]
    %v87 = vld [vmem:[%s1 + $0xa0] sm:$0xff]
    %v88 = vld [vmem:[%s1 + $0xa8] sm:$0xff]
    %v89 = vld [vmem:[%s1 + $0xb0] sm:$0xff]
    %v90 = vld [vmem:[%s1 + $0xb8] sm:$0xff]
    %v91 = vld [vmem:[%s1 + $0xc0] sm:$0xff]
    %v92 = vld [vmem:[%s1 + $0xc8] sm:$0xff]
    %v93 = vld [vmem:[%s1 + $0xd0] sm:$0xff]
    %v94 = vld [vmem:[%s1 + $0xd8] sm:$0xff]
    %v95 = vld [vmem:[%s1 + $0xe0] sm:$0xff]
    %v96 = vld [vmem:[%s1 + $0xe8] sm:$0xff]
    %v97 = vld [vmem:[%s1 + $0xf0] sm:$0xff]
    %v98 = vld [vmem:[%s1 + $0xf8] sm:$0xff]
    %v99 = vld [vmem:[%s1 + $0x100] sm:$0xff]
    %v100 = vld [vmem:[%s1 + $0x108] sm:$0xff]
    %v101 = vld [vmem:[%s1 + $0x110] sm:$0xff]
    %v102 = vld [vmem:[%s1 + $0x118] sm:$0xff]
    %v103 = vld [vmem:[%s1 + $0x120] sm:$0xff]
    %v104 = vld [vmem:[%s1 + $0x128] sm:$0xff]
    %v105 = vld [vmem:[%s1 + $0x130] sm:$0xff]
    %v106 = vld [vmem:[%s1 + $0x138] sm:$0xff]
    %v107 = vld [vmem:[%s1 + $0x140] sm:$0xff]
    %v108 = vld [vmem:[%s1 + $0x148] sm:$0xff]
    %v109 = vld [vmem:[%s1 + $0x150] sm:$0xff]
    %v110 = vld [vmem:[%s1 + $0x158] sm:$0xff]
    %v111 = vld [vmem:[%s1 + $0x160] sm:$0xff]
    %v112 = vld [vmem:[%s1 + $0x168] sm:$0xff]
    %v113 = vld [vmem:[%s1 + $0x170] sm:$0xff]
    %v114 = vld [vmem:[%s1 + $0x178] sm:$0xff]
    %v115 = vld [vmem:[%s1 + $0x180] sm:$0xff]
    %v116 = vld [vmem:[%s1 + $0x188] sm:$0xff]
    %v117 = vld [vmem:[%s1 + $0x190] sm:$0xff]
    %v118 = vld [vmem:[%s1 + $0x198] sm:$0xff]
    %v119 = vld [vmem:[%s1 + $0x1a0] sm:$0xff]
    %v120 = vld [vmem:[%s1 + $0x1a8] sm:$0xff]
    %v121 = vld [vmem:[%s1 + $0x1b0] sm:$0xff]
    %v122 = vld [vmem:[%s1 + $0x1b8] sm:$0xff]
    %v123 = vld [vmem:[%s1 + $0x1c0] sm:$0xff]
    %v124 = vld [vmem:[%s1 + $0x1c8] sm:$0xff]
    %v125 = vld [vmem:[%s1 + $0x1d0] sm:$0xff]
    %v126 = vld [vmem:[%s1 + $0x1d8] sm:$0xff]
    %v127 = vld [vmem:[%s1 + $0x1e0] sm:$0xff]
    %v128 = vld [vmem:[%s1 + $0x1e8] sm:$0xff]
    %v129 = vld [vmem:[%s1 + $0x1f0] sm:$0xff]
    %v130 = vld [vmem:[%s1 + $0x1f8] sm:$0xff]
    %v131 = vld [vmem:[%s1 + $0x200] sm:$0xff]
    %v132 = vld [vmem:[%s1 + $0x208] sm:$0xff]
    %v133 = vld [vmem:[%s1 + $0x210] sm:$0xff]
    %v134 = vld [vmem:[%s1 + $0x218] sm:$0xff]
    %v135 = vld [vmem:[%s1 + $0x220] sm:$0xff]
    %v136 = vld [vmem:[%s1 + $0x228] sm:$0xff]
    %v137 = vld [vmem:[%s1 + $0x230] sm:$0xff]
    %v138 = vld [vmem:[%s1 + $0x238] sm:$0xff]
    %v139 = vld [vmem:[%s1 + $0x240] sm:$0xff]
    %v140 = vld [vmem:[%s1 + $0x248] sm:$0xff]
    %v141 = vld [vmem:[%s1 + $0x250] sm:$0xff]
    %v142 = vld [vmem:[%s1 + $0x258] sm:$0xff]
    %v143 = vld [vmem:[%s1 + $0x260] sm:$0xff]
    %v144 = vld [vmem:[%s1 + $0x268] sm:$0xff]
    %v145 = vld [vmem:[%s1 + $0x270] sm:$0xff]
    %v146 = vld [vmem:[%s1 + $0x278] sm:$0xff]
    %v147 = vld [vmem:[%s1 + $0x280] sm:$0xff]
    %v148 = vld [vmem:[%s1 + $0x288] sm:$0xff]
    %v149 = vld [vmem:[%s1 + $0x290] sm:$0xff]
    %v150 = vld [vmem:[%s1 + $0x298] sm:$0xff]
    %v151 = vld [vmem:[%s1 + $0x2a0] sm:$0xff]
    %v152 = vld [vmem:[%s1 + $0x2a8] sm:$0xff]
    %v153 = vld [vmem:[%s1 + $0x2b0] sm:$0xff]
    %v154 = vld [vmem:[%s1 + $0x2b8] sm:$0xff]
    %v155 = vld [vmem:[%s1 + $0x2c0] sm:$0xff]
    %v156 = vld [vmem:[%s1 + $0x2c8] sm:$0xff]
    %v157 = vld [vmem:[%s1 + $0x2d0] sm:$0xff]
    %v158 = vld [vmem:[%s1 + $0x2d8] sm:$0xff]
    %v159 = vld [vmem:[%s1 + $0x2e0] sm:$0xff]
    %v160 = vld [vmem:[%s1 + $0x2e8] sm:$0xff]
    %v161 = vld [vmem:[%s1 + $0x2f0] sm:$0xff]
    %v162 = vld [vmem:[%s1 + $0x2f8] sm:$0xff]
    %v163 = vld [vmem:[%s1 + $0x300] sm:$0xff]
    %v164 = vld [vmem:[%s1 + $0x308] sm:$0xff]
    %v165 = vld [vmem:[%s1 + $0x310] sm:$0xff]
    %v166 = vld [vmem:[%s1 + $0x318] sm:$0xff]
    %v167 = vld [vmem:[%s1 + $0x320] sm:$0xff]
    %v168 = vld [vmem:[%s1 + $0x328] sm:$0xff]
    %v169 = vld [vmem:[%s1 + $0x330] sm:$0xff]
    %v170 = vld [vmem:[%s1 + $0x338] sm:$0xff]
    %v171 = vld [vmem:[%s1 + $0x340] sm:$0xff]
    %v172 = vld [vmem:[%s1 + $0x348] sm:$0xff]
    %v173 = vld [vmem:[%s1 + $0x350] sm:$0xff]
    %v174 = vld [vmem:[%s1 + $0x358] sm:$0xff]
    %v175 = vld [vmem:[%s1 + $0x360] sm:$0xff]
    %v176 = vld [vmem:[%s1 + $0x368] sm:$0xff]
    %v177 = vld [vmem:[%s1 + $0x370] sm:$0xff]
    %v178 = vld [vmem:[%s1 + $0x378] sm:$0xff]
    %v179 = vld [vmem:[%s1 + $0x380] sm:$0xff]
    %v180 = vld [vmem:[%s1 + $0x388] sm:$0xff]
    %v181 = vld [vmem:[%s1 + $0x390] sm:$0xff]
    %v182 = vld [vmem:[%s1 + $0x398] sm:$0xff]
    %v183 = vld [vmem:[%s1 + $0x3a0] sm:$0xff]
    %v184 = vld [vmem:[%s1 + $0x3a8] sm:$0xff]
    %v185 = vld [vmem:[%s1 + $0x3b0] sm:$0xff]
    %v186 = vld [vmem:[%s1 + $0x3b8] sm:$0xff]
    %vm187 = vcmask 785408
    %v189 = vsel %vm187, %v42, 0
    %v192 = vsel %vm187, %v46, 0
    %v195 = vsel %vm187, %v50, 0
    %v198 = vsel %vm187, %v54, 0
    %v201 = vsel %vm187, %v58, 0
    %v204 = vsel %vm187, %v62, 0
    %v207 = vsel %vm187, %v66, 0
    %209 = vmatprep.subr.mxu0 %v98
    %210 = vmatpush1.msra.mxu0 %v97
    %211 = vmatprep.subr.mxu0 %v96
    %212 = vmatpush1.msra.mxu0 %v95
    %213 = vmatprep.subr.mxu0 %v94
    %214 = vmatpush1.msra.mxu0 %v93
    %215 = vmatprep.subr.mxu0 %v92
    %216 = vmatpush1.msra.mxu0 %v91
    %217 = vmatprep.subr.mxu0 %v90
    %218 = vmatpush1.msra.mxu0 %v89
    %219 = vmatprep.subr.mxu0 %v88
    %220 = vmatpush1.msra.mxu0 %v87
    %221 = vmatprep.subr.mxu0 %v86
    %222 = vmatpush1.msra.mxu0 %v85
    %223 = vmatprep.subr.mxu0 %v84
    %224 = vmatpush1.msra.mxu0 %v83
    %225 = vmatprep.subr.mxu0 %v82
    %226 = vmatpush1.msra.mxu0 %v81
    %227 = vmatprep.subr.mxu0 %v80
    %228 = vmatpush1.msra.mxu0 %v79
    %229 = vmatprep.subr.mxu0 %v78
    %230 = vmatpush1.msra.mxu0 %v77
    %231 = vmatprep.subr.mxu0 %v76
    %232 = vmatpush1.msra.mxu0 %v75
    %233 = vmatprep.subr.mxu0 %v74
    %234 = vmatpush1.msra.mxu0 %v73
    %235 = vmatprep.subr.mxu0 %v72
    %236 = vmatpush1.msra.mxu0 %v71
    %237 = vmatprep.subr.mxu0 %v70
    %238 = vmatpush1.msra.mxu0 %v69
    %239 = vmatprep.subr.mxu0 %v68
    %240 = vmatpush1.msra.mxu0 %v67
    %241 = vmatprep.subr.mxu0 %v130
    %242 = vmatpush2.msra.mxu0 %v129
    %243 = vmatprep.subr.mxu0 %v128
    %244 = vmatpush2.msra.mxu0 %v127
    %245 = vmatprep.subr.mxu0 %v126
    %246 = vmatpush2.msra.mxu0 %v125
    %247 = vmatprep.subr.mxu0 %v124
    %248 = vmatpush2.msra.mxu0 %v123
    %249 = vmatprep.subr.mxu0 %v122
    %250 = vmatpush2.msra.mxu0 %v121
    %251 = vmatprep.subr.mxu0 %v120
    %252 = vmatpush2.msra.mxu0 %v119
    %253 = vmatprep.subr.mxu0 %v118
    %254 = vmatpush2.msra.mxu0 %v117
    %255 = vmatprep.subr.mxu0 %v116
    %256 = vmatpush2.msra.mxu0 %v115
    %257 = vmatprep.subr.mxu0 %v114
    %258 = vmatpush2.msra.mxu0 %v113
    %259 = vmatprep.subr.mxu0 %v112
    %260 = vmatpush2.msra.mxu0 %v111
    %261 = vmatprep.subr.mxu0 %v110
    %262 = vmatpush2.msra.mxu0 %v109
    %263 = vmatprep.subr.mxu0 %v108
    %264 = vmatpush2.msra.mxu0 %v107
    %265 = vmatprep.subr.mxu0 %v106
    %266 = vmatpush2.msra.mxu0 %v105
    %267 = vmatprep.subr.mxu0 %v104
    %268 = vmatpush2.msra.mxu0 %v103
    %269 = vmatprep.subr.mxu0 %v102
    %270 = vmatpush2.msra.mxu0 %v101
    %271 = vmatprep.subr.mxu0 %v100
    %272 = vmatpush2.msra.mxu0 %v99
    %273 = vmatprep.mubr.f32.mxu0 %v40
    %274 = vmatmul.mubr.f32.gmra.mxu0 %v39
    %v275 = vpop.f32.mrf.mxu0
    %v276 = vadd.f32 0.0, %v275
    %v277 = vpop.f32.mrf.mxu0
    %v278 = vadd.f32 0.0, %v277
    %279 = vmatprep.mubr.f32.mxu0 %v44
    %280 = vmatmul.mubr.f32.gmra.mxu0 %v43
    %v281 = vpop.f32.mrf.mxu0
    %v282 = vadd.f32 0.0, %v281
    %v283 = vpop.f32.mrf.mxu0
    %v284 = vadd.f32 0.0, %v283
    %285 = vmatprep.mubr.f32.mxu0 %v48
    %286 = vmatmul.mubr.f32.gmra.mxu0 %v47
    %v287 = vpop.f32.mrf.mxu0
    %v288 = vadd.f32 0.0, %v287
    %v289 = vpop.f32.mrf.mxu0
    %v290 = vadd.f32 0.0, %v289
    %291 = vmatprep.mubr.f32.mxu0 %v52
    %292 = vmatmul.mubr.f32.gmra.mxu0 %v51
    %v293 = vpop.f32.mrf.mxu0
    %v294 = vadd.f32 0.0, %v293
    %v295 = vpop.f32.mrf.mxu0
    %v296 = vadd.f32 0.0, %v295
    %297 = vmatprep.mubr.f32.mxu0 %v56
    %298 = vmatmul.mubr.f32.gmra.mxu0 %v55
    %v299 = vpop.f32.mrf.mxu0
    %v300 = vadd.f32 0.0, %v299
    %v301 = vpop.f32.mrf.mxu0
    %v302 = vadd.f32 0.0, %v301
    %303 = vmatprep.mubr.f32.mxu0 %v60
    %304 = vmatmul.mubr.f32.gmra.mxu0 %v59
    %v305 = vpop.f32.mrf.mxu0
    %v306 = vadd.f32 0.0, %v305
    %v307 = vpop.f32.mrf.mxu0
    %v308 = vadd.f32 0.0, %v307
    %309 = vmatprep.mubr.f32.mxu0 %v64
    %310 = vmatmul.mubr.f32.gmra.mxu0 %v63
    %v311 = vpop.f32.mrf.mxu0
    %v312 = vadd.f32 0.0, %v311
    %v313 = vpop.f32.mrf.mxu0
    %v314 = vadd.f32 0.0, %v313
    %315 = vdwg.mxu0
    %316 = vmatprep.subr.mxu0 %v162
    %317 = vmatpush1.msra.mxu0 %v161
    %318 = vmatprep.subr.mxu0 %v160
    %319 = vmatpush1.msra.mxu0 %v159
    %320 = vmatprep.subr.mxu0 %v158
    %321 = vmatpush1.msra.mxu0 %v157
    %322 = vmatprep.subr.mxu0 %v156
    %323 = vmatpush1.msra.mxu0 %v155
    %324 = vmatprep.subr.mxu0 %v154
    %325 = vmatpush1.msra.mxu0 %v153
    %326 = vmatprep.subr.mxu0 %v152
    %327 = vmatpush1.msra.mxu0 %v151
    %328 = vmatprep.subr.mxu0 %v150
    %329 = vmatpush1.msra.mxu0 %v149
    %330 = vmatprep.subr.mxu0 %v148
    %331 = vmatpush1.msra.mxu0 %v147
    %332 = vmatprep.subr.mxu0 %v146
    %333 = vmatpush1.msra.mxu0 %v145
    %334 = vmatprep.subr.mxu0 %v144
    %335 = vmatpush1.msra.mxu0 %v143
    %336 = vmatprep.subr.mxu0 %v142
    %337 = vmatpush1.msra.mxu0 %v141
    %338 = vmatprep.subr.mxu0 %v140
    %339 = vmatpush1.msra.mxu0 %v139
    %340 = vmatprep.subr.mxu0 %v138
    %341 = vmatpush1.msra.mxu0 %v137
    %342 = vmatprep.subr.mxu0 %v136
    %343 = vmatpush1.msra.mxu0 %v135
    %344 = vmatprep.subr.mxu0 %v134
    %345 = vmatpush1.msra.mxu0 %v133
    %346 = vmatprep.subr.mxu0 %v132
    %347 = vmatpush1.msra.mxu0 %v131
    %348 = vmatprep.subr.mxu0 0.0
    %349 = vmatpush2.msra.mxu0 0.0
    %350 = vmatprep.subr.mxu0 0.0
    %351 = vmatpush2.msra.mxu0 0.0
    %352 = vmatprep.subr.mxu0 0.0
    %353 = vmatpush2.msra.mxu0 0.0
    %354 = vmatprep.subr.mxu0 0.0
    %355 = vmatpush2.msra.mxu0 0.0
    %356 = vmatprep.subr.mxu0 %v186
    %357 = vmatpush2.msra.mxu0 %v185
    %358 = vmatprep.subr.mxu0 %v184
    %359 = vmatpush2.msra.mxu0 %v183
    %360 = vmatprep.subr.mxu0 %v182
    %361 = vmatpush2.msra.mxu0 %v181
    %362 = vmatprep.subr.mxu0 %v180
    %363 = vmatpush2.msra.mxu0 %v179
    %364 = vmatprep.subr.mxu0 %v178
    %365 = vmatpush2.msra.mxu0 %v177
    %366 = vmatprep.subr.mxu0 %v176
    %367 = vmatpush2.msra.mxu0 %v175
    %368 = vmatprep.subr.mxu0 %v174
    %369 = vmatpush2.msra.mxu0 %v173
    %370 = vmatprep.subr.mxu0 %v172
    %371 = vmatpush2.msra.mxu0 %v171
    %372 = vmatprep.subr.mxu0 %v170
    %373 = vmatpush2.msra.mxu0 %v169
    %374 = vmatprep.subr.mxu0 %v168
    %375 = vmatpush2.msra.mxu0 %v167
    %376 = vmatprep.subr.mxu0 %v166
    %377 = vmatpush2.msra.mxu0 %v165
    %378 = vmatprep.subr.mxu0 %v164
    %379 = vmatpush2.msra.mxu0 %v163
    %380 = vmatprep.mubr.f32.mxu0 %v189
    %381 = vmatmul.mubr.f32.gmra.mxu0 %v41
    %v382 = vpop.f32.mrf.mxu0
    %v383 = vadd.f32 %v276, %v382
    %v384 = vpop.f32.mrf.mxu0
    %v385 = vadd.f32 %v278, %v384
    %386 = vmatprep.mubr.f32.mxu0 %v192
    %387 = vmatmul.mubr.f32.gmra.mxu0 %v45
    %v388 = vpop.f32.mrf.mxu0
    %v389 = vadd.f32 %v282, %v388
    %v390 = vpop.f32.mrf.mxu0
    %v391 = vadd.f32 %v284, %v390
    %392 = vmatprep.mubr.f32.mxu0 %v195
    %393 = vmatmul.mubr.f32.gmra.mxu0 %v49
    %v394 = vpop.f32.mrf.mxu0
    %v395 = vadd.f32 %v288, %v394
    %v396 = vpop.f32.mrf.mxu0
    %v397 = vadd.f32 %v290, %v396
    %398 = vmatprep.mubr.f32.mxu0 %v198
    %399 = vmatmul.mubr.f32.gmra.mxu0 %v53
    %v400 = vpop.f32.mrf.mxu0
    %v401 = vadd.f32 %v294, %v400
    %v402 = vpop.f32.mrf.mxu0
    %v403 = vadd.f32 %v296, %v402
    %404 = vmatprep.mubr.f32.mxu0 %v201
    %405 = vmatmul.mubr.f32.gmra.mxu0 %v57
    %v406 = vpop.f32.mrf.mxu0
    %v407 = vadd.f32 %v300, %v406
    %v408 = vpop.f32.mrf.mxu0
    %v409 = vadd.f32 %v302, %v408
    %410 = vmatprep.mubr.f32.mxu0 %v204
    %411 = vmatmul.mubr.f32.gmra.mxu0 %v61
    %v412 = vpop.f32.mrf.mxu0
    %v413 = vadd.f32 %v306, %v412
    %v414 = vpop.f32.mrf.mxu0
    %v415 = vadd.f32 %v308, %v414
    %416 = vmatprep.mubr.f32.mxu0 %v207
    %417 = vmatmul.mubr.f32.gmra.mxu0 %v65
    %v418 = vpop.f32.mrf.mxu0
    %v419 = vadd.f32 %v312, %v418
    %v420 = vpop.f32.mrf.mxu0
    %v421 = vadd.f32 %v314, %v420
    %422 = vdwg.mxu0
    %v423 = vmax.f32 %v383, %v385
    %v424 = vmax.f32 %v389, %v391
    %v425 = vmax.f32 %v395, %v397
    %v426 = vmax.f32 %v401, %v403
    %v427 = vmax.f32 %v407, %v409
    %v428 = vmax.f32 %v413, %v415
    %v429 = vmax.f32 %v419, %v421
    %v430 = vld [vmem:[%s2] sm:$0x1]
    %vm434 = vcmask 1041408
    %v435 = vrot.slane %v424, 6
    %v436 = vrot.slane %v425, 6
    %v437 = vsel %vm434, %v435, %v436
    %v438 = vrot.slane %v426, 6
    %v439 = vsel %vm434, %v436, %v438
    %v442 = vmax.f32 %v423, %v437
    %v443 = vmax.f32 %v424, %v439
    %v445 = vlaneseq
    %v446 = vshrl.u32 %v445, 7
    %v447 = vsub.s32 0, %v446
    %v448 = vrot.slane %v430, %v447
    %v450 = vadd.f32 %v442, %v448
    %v451 = vadd.f32 %v443, %v448
    %v452 = vtanh.pop %v450
    %v453 = vtanh.pop %v451
    %v456 = vrot.slane %v428, 6
    %v457 = vrot.slane %v429, 6
    %v458 = vsel %vm434, %v456, %v457
    %v462 = vmax.f32 %v426, %v456
    %v463 = vmax.f32 %v427, %v458
    %v464 = vmax.f32 %v428, %v457
    %v465 = vadd.f32 %v462, %v448
    %v466 = vadd.f32 %v463, %v448
    %v467 = vadd.f32 %v464, %v448
    %v468 = vtanh.pop %v465
    %v469 = vtanh.pop %v466
    %v470 = vtanh.pop %v467
    %v471 = vld [vmem:[%s4] sm:$0x1]
    %v472 = vld [vmem:[%s3] sm:$0xff]
    %v473 = vld [vmem:[%s3 + $0x8] sm:$0xff]
    %v474 = vld [vmem:[%s3 + $0x10] sm:$0xff]
    %v475 = vld [vmem:[%s3 + $0x18] sm:$0xff]
    %v476 = vld [vmem:[%s3 + $0x20] sm:$0xff]
    %v477 = vld [vmem:[%s3 + $0x28] sm:$0xff]
    %v478 = vld [vmem:[%s3 + $0x30] sm:$0xff]
    %v479 = vld [vmem:[%s3 + $0x38] sm:$0xff]
    %v480 = vld [vmem:[%s3 + $0x40] sm:$0xff]
    %v481 = vld [vmem:[%s3 + $0x48] sm:$0xff]
    %v482 = vld [vmem:[%s3 + $0x50] sm:$0xff]
    %v483 = vld [vmem:[%s3 + $0x58] sm:$0xff]
    %v484 = vld [vmem:[%s3 + $0x60] sm:$0xff]
    %v485 = vld [vmem:[%s3 + $0x68] sm:$0xff]
    %v486 = vld [vmem:[%s3 + $0x70] sm:$0xff]
    %v487 = vld [vmem:[%s3 + $0x78] sm:$0xff]
    %v488 = vld [vmem:[%s3 + $0x80] sm:$0xff]
    %v489 = vld [vmem:[%s3 + $0x88] sm:$0xff]
    %v490 = vld [vmem:[%s3 + $0x90] sm:$0xff]
    %v491 = vld [vmem:[%s3 + $0x98] sm:$0xff]
    %v492 = vld [vmem:[%s3 + $0xa0] sm:$0xf]
    %v493 = vld [vmem:[%s3 + $0xa8] sm:$0xf]
    %s494 = scalar_lea.vmem %s3, 176
    %v495 = vld [vmem:[%s494] sm:$0xff]
    %v496 = vld [vmem:[%s494 + $0x8] sm:$0xff]
    %v497 = vld [vmem:[%s494 + $0x10] sm:$0xff]
    %v498 = vld [vmem:[%s494 + $0x18] sm:$0xff]
    %v499 = vld [vmem:[%s494 + $0x20] sm:$0xff]
    %v500 = vld [vmem:[%s494 + $0x28] sm:$0xff]
    %v501 = vld [vmem:[%s494 + $0x30] sm:$0xff]
    %v502 = vld [vmem:[%s494 + $0x38] sm:$0xff]
    %v503 = vld [vmem:[%s494 + $0x40] sm:$0xff]
    %v504 = vld [vmem:[%s494 + $0x48] sm:$0xff]
    %v505 = vld [vmem:[%s494 + $0x50] sm:$0xff]
    %v506 = vld [vmem:[%s494 + $0x58] sm:$0xff]
    %v507 = vld [vmem:[%s494 + $0x60] sm:$0xff]
    %v508 = vld [vmem:[%s494 + $0x68] sm:$0xff]
    %v509 = vld [vmem:[%s494 + $0x70] sm:$0xff]
    %v510 = vld [vmem:[%s494 + $0x78] sm:$0xff]
    %v511 = vld [vmem:[%s494 + $0x80] sm:$0xff]
    %v512 = vld [vmem:[%s494 + $0x88] sm:$0xff]
    %v513 = vld [vmem:[%s494 + $0x90] sm:$0xff]
    %v514 = vld [vmem:[%s494 + $0x98] sm:$0xff]
    %v515 = vld [vmem:[%s494 + $0xa0] sm:$0xf]
    %v516 = vld [vmem:[%s494 + $0xa8] sm:$0xf]
    %vm519 = vcmask 1043456
    %v520 = vrot.slane %v468, 4
    %v521 = vrot.slane %v469, 4
    %v522 = vsel %vm519, %v520, %v521
    %vm523 = vcmask 687104
    %v524 = vsel %vm523, %v522, 0
    %v526 = vsel %vm523, %v521, 0
    %v529 = vsel %vm519, %v515, 0
    %v532 = vsel %vm519, %v516, 0
    %534 = vmatprep.subr.mxu0 0.0
    %535 = vmatpush1.msra.mxu0 0.0
    %536 = vmatprep.subr.mxu0 0.0
    %537 = vmatpush1.msra.mxu0 0.0
    %538 = vmatprep.subr.mxu0 0.0
    %539 = vmatpush1.msra.mxu0 0.0
    %540 = vmatprep.subr.mxu0 0.0
    %541 = vmatpush1.msra.mxu0 0.0
    %542 = vmatprep.subr.mxu0 0.0
    %543 = vmatpush1.msra.mxu0 0.0
    %544 = vmatprep.subr.mxu0 %v532
    %545 = vmatpush1.msra.mxu0 %v529
    %546 = vmatprep.subr.mxu0 %v514
    %547 = vmatpush1.msra.mxu0 %v513
    %548 = vmatprep.subr.mxu0 %v512
    %549 = vmatpush1.msra.mxu0 %v511
    %550 = vmatprep.subr.mxu0 %v510
    %551 = vmatpush1.msra.mxu0 %v509
    %552 = vmatprep.subr.mxu0 %v508
    %553 = vmatpush1.msra.mxu0 %v507
    %554 = vmatprep.subr.mxu0 %v506
    %555 = vmatpush1.msra.mxu0 %v505
    %556 = vmatprep.subr.mxu0 %v504
    %557 = vmatpush1.msra.mxu0 %v503
    %558 = vmatprep.subr.mxu0 %v502
    %559 = vmatpush1.msra.mxu0 %v501
    %560 = vmatprep.subr.mxu0 %v500
    %561 = vmatpush1.msra.mxu0 %v499
    %562 = vmatprep.subr.mxu0 %v498
    %563 = vmatpush1.msra.mxu0 %v497
    %564 = vmatprep.subr.mxu0 %v496
    %565 = vmatpush1.msra.mxu0 %v495
    %566 = vmatprep.subr.mxu0 0.0
    %567 = vmatpush2.msra.mxu0 0.0
    %568 = vmatprep.subr.mxu0 0.0
    %569 = vmatpush2.msra.mxu0 0.0
    %570 = vmatprep.subr.mxu0 0.0
    %571 = vmatpush2.msra.mxu0 0.0
    %572 = vmatprep.subr.mxu0 0.0
    %573 = vmatpush2.msra.mxu0 0.0
    %574 = vmatprep.subr.mxu0 0.0
    %575 = vmatpush2.msra.mxu0 0.0
    %576 = vmatprep.subr.mxu0 0.0
    %577 = vmatpush2.msra.mxu0 0.0
    %578 = vmatprep.subr.mxu0 0.0
    %579 = vmatpush2.msra.mxu0 0.0
    %580 = vmatprep.subr.mxu0 0.0
    %581 = vmatpush2.msra.mxu0 0.0
    %582 = vmatprep.subr.mxu0 0.0
    %583 = vmatpush2.msra.mxu0 0.0
    %584 = vmatprep.subr.mxu0 0.0
    %585 = vmatpush2.msra.mxu0 0.0
    %586 = vmatprep.subr.mxu0 0.0
    %587 = vmatpush2.msra.mxu0 0.0
    %588 = vmatprep.subr.mxu0 0.0
    %589 = vmatpush2.msra.mxu0 0.0
    %590 = vmatprep.subr.mxu0 0.0
    %591 = vmatpush2.msra.mxu0 0.0
    %592 = vmatprep.subr.mxu0 0.0
    %593 = vmatpush2.msra.mxu0 0.0
    %594 = vmatprep.subr.mxu0 0.0
    %595 = vmatpush2.msra.mxu0 0.0
    %596 = vmatprep.subr.mxu0 0.0
    %597 = vmatpush2.msra.mxu0 0.0
    %598 = vmatprep.mubr.f32.mxu0 0.0
    %599 = vmatmul.mubr.f32.gmra.mxu0 %v524
    %v600 = vpop.f32.mrf.mxu0
    %v601 = vadd.f32 0.0, %v600
    %v602 = vpop.f32.mrf.mxu0
    %v603 = vadd.f32 0.0, %v602
    %604 = vmatprep.mubr.f32.mxu0 0.0
    %605 = vmatmul.mubr.f32.gmra.mxu0 %v526
    %v606 = vpop.f32.mrf.mxu0
    %v607 = vadd.f32 0.0, %v606
    %v608 = vpop.f32.mrf.mxu0
    %v609 = vadd.f32 0.0, %v608
    %610 = vdwg.mxu0
    %v612 = vsel %vm523, %v452, 0
    %v615 = vsel %vm523, %v453, 0
    %v618 = vsel %vm519, %v492, 0
    %v621 = vsel %vm519, %v493, 0
    %623 = vmatprep.subr.mxu0 0.0
    %624 = vmatpush1.msra.mxu0 0.0
    %625 = vmatprep.subr.mxu0 0.0
    %626 = vmatpush1.msra.mxu0 0.0
    %627 = vmatprep.subr.mxu0 0.0
    %628 = vmatpush1.msra.mxu0 0.0
    %629 = vmatprep.subr.mxu0 0.0
    %630 = vmatpush1.msra.mxu0 0.0
    %631 = vmatprep.subr.mxu0 0.0
    %632 = vmatpush1.msra.mxu0 0.0
    %633 = vmatprep.subr.mxu0 %v621
    %634 = vmatpush1.msra.mxu0 %v618
    %635 = vmatprep.subr.mxu0 %v491
    %636 = vmatpush1.msra.mxu0 %v490
    %637 = vmatprep.subr.mxu0 %v489
    %638 = vmatpush1.msra.mxu0 %v488
    %639 = vmatprep.subr.mxu0 %v487
    %640 = vmatpush1.msra.mxu0 %v486
    %641 = vmatprep.subr.mxu0 %v485
    %642 = vmatpush1.msra.mxu0 %v484
    %643 = vmatprep.subr.mxu0 %v483
    %644 = vmatpush1.msra.mxu0 %v482
    %645 = vmatprep.subr.mxu0 %v481
    %646 = vmatpush1.msra.mxu0 %v480
    %647 = vmatprep.subr.mxu0 %v479
    %648 = vmatpush1.msra.mxu0 %v478
    %649 = vmatprep.subr.mxu0 %v477
    %650 = vmatpush1.msra.mxu0 %v476
    %651 = vmatprep.subr.mxu0 %v475
    %652 = vmatpush1.msra.mxu0 %v474
    %653 = vmatprep.subr.mxu0 %v473
    %654 = vmatpush1.msra.mxu0 %v472
    %655 = vmatprep.subr.mxu0 0.0
    %656 = vmatpush2.msra.mxu0 0.0
    %657 = vmatprep.subr.mxu0 0.0
    %658 = vmatpush2.msra.mxu0 0.0
    %659 = vmatprep.subr.mxu0 0.0
    %660 = vmatpush2.msra.mxu0 0.0
    %661 = vmatprep.subr.mxu0 0.0
    %662 = vmatpush2.msra.mxu0 0.0
    %663 = vmatprep.subr.mxu0 0.0
    %664 = vmatpush2.msra.mxu0 0.0
    %665 = vmatprep.subr.mxu0 0.0
    %666 = vmatpush2.msra.mxu0 0.0
    %667 = vmatprep.subr.mxu0 0.0
    %668 = vmatpush2.msra.mxu0 0.0
    %669 = vmatprep.subr.mxu0 0.0
    %670 = vmatpush2.msra.mxu0 0.0
    %671 = vmatprep.subr.mxu0 0.0
    %672 = vmatpush2.msra.mxu0 0.0
    %673 = vmatprep.subr.mxu0 0.0
    %674 = vmatpush2.msra.mxu0 0.0
    %675 = vmatprep.subr.mxu0 0.0
    %676 = vmatpush2.msra.mxu0 0.0
    %677 = vmatprep.subr.mxu0 0.0
    %678 = vmatpush2.msra.mxu0 0.0
    %679 = vmatprep.subr.mxu0 0.0
    %680 = vmatpush2.msra.mxu0 0.0
    %681 = vmatprep.subr.mxu0 0.0
    %682 = vmatpush2.msra.mxu0 0.0
    %683 = vmatprep.subr.mxu0 0.0
    %684 = vmatpush2.msra.mxu0 0.0
    %685 = vmatprep.subr.mxu0 0.0
    %686 = vmatpush2.msra.mxu0 0.0
    %687 = vmatprep.mubr.f32.mxu0 0.0
    %688 = vmatmul.mubr.f32.gmra.mxu0 %v612
    %v689 = vpop.f32.mrf.mxu0
    %v690 = vadd.f32 %v601, %v689
    %v691 = vpop.f32.mrf.mxu0
    %v692 = vadd.f32 %v603, %v691
    %693 = vmatprep.mubr.f32.mxu0 0.0
    %694 = vmatmul.mubr.f32.gmra.mxu0 %v615
    %v695 = vpop.f32.mrf.mxu0
    %v696 = vadd.f32 %v607, %v695
    %v697 = vpop.f32.mrf.mxu0
    %v698 = vadd.f32 %v609, %v697
    %699 = vdwg.mxu0
    %s700 = scalar_lea.vmem %s3, 352
    %v701 = vld [vmem:[%s700] sm:$0xff]
    %v702 = vld [vmem:[%s700 + $0x8] sm:$0xff]
    %v703 = vld [vmem:[%s700 + $0x10] sm:$0xff]
    %v704 = vld [vmem:[%s700 + $0x18] sm:$0xff]
    %v705 = vld [vmem:[%s700 + $0x20] sm:$0xff]
    %v706 = vld [vmem:[%s700 + $0x28] sm:$0xff]
    %v707 = vld [vmem:[%s700 + $0x30] sm:$0xff]
    %v708 = vld [vmem:[%s700 + $0x38] sm:$0xff]
    %v709 = vld [vmem:[%s700 + $0x40] sm:$0xff]
    %v710 = vld [vmem:[%s700 + $0x48] sm:$0xff]
    %v711 = vld [vmem:[%s700 + $0x50] sm:$0xff]
    %v712 = vld [vmem:[%s700 + $0x58] sm:$0xff]
    %v713 = vld [vmem:[%s700 + $0x60] sm:$0xff]
    %v714 = vld [vmem:[%s700 + $0x68] sm:$0xff]
    %v715 = vld [vmem:[%s700 + $0x70] sm:$0xff]
    %v716 = vld [vmem:[%s700 + $0x78] sm:$0xff]
    %v717 = vld [vmem:[%s700 + $0x80] sm:$0xff]
    %v718 = vld [vmem:[%s700 + $0x88] sm:$0xff]
    %v719 = vld [vmem:[%s700 + $0x90] sm:$0xff]
    %v720 = vld [vmem:[%s700 + $0x98] sm:$0xff]
    %v721 = vld [vmem:[%s700 + $0xa0] sm:$0xf]
    %v722 = vld [vmem:[%s700 + $0xa8] sm:$0xf]
    %vm723 = vcmask 1045504
    %v724 = vrot.slane %v452, 2
    %v725 = vrot.slane %v453, 2
    %v726 = vsel %vm723, %v724, %v725
    %v727 = vsel %vm523, %v726, 0
    %v729 = vsel %vm523, %v725, 0
    %v732 = vsel %vm519, %v721, 0
    %v735 = vsel %vm519, %v722, 0
    %737 = vmatprep.subr.mxu0 0.0
    %738 = vmatpush1.msra.mxu0 0.0
    %739 = vmatprep.subr.mxu0 0.0
    %740 = vmatpush1.msra.mxu0 0.0
    %741 = vmatprep.subr.mxu0 0.0
    %742 = vmatpush1.msra.mxu0 0.0
    %743 = vmatprep.subr.mxu0 0.0
    %744 = vmatpush1.msra.mxu0 0.0
    %745 = vmatprep.subr.mxu0 0.0
    %746 = vmatpush1.msra.mxu0 0.0
    %747 = vmatprep.subr.mxu0 %v735
    %748 = vmatpush1.msra.mxu0 %v732
    %749 = vmatprep.subr.mxu0 %v720
    %750 = vmatpush1.msra.mxu0 %v719
    %751 = vmatprep.subr.mxu0 %v718
    %752 = vmatpush1.msra.mxu0 %v717
    %753 = vmatprep.subr.mxu0 %v716
    %754 = vmatpush1.msra.mxu0 %v715
    %755 = vmatprep.subr.mxu0 %v714
    %756 = vmatpush1.msra.mxu0 %v713
    %757 = vmatprep.subr.mxu0 %v712
    %758 = vmatpush1.msra.mxu0 %v711
    %759 = vmatprep.subr.mxu0 %v710
    %760 = vmatpush1.msra.mxu0 %v709
    %761 = vmatprep.subr.mxu0 %v708
    %762 = vmatpush1.msra.mxu0 %v707
    %763 = vmatprep.subr.mxu0 %v706
    %764 = vmatpush1.msra.mxu0 %v705
    %765 = vmatprep.subr.mxu0 %v704
    %766 = vmatpush1.msra.mxu0 %v703
    %767 = vmatprep.subr.mxu0 %v702
    %768 = vmatpush1.msra.mxu0 %v701
    %769 = vmatprep.subr.mxu0 0.0
    %770 = vmatpush2.msra.mxu0 0.0
    %771 = vmatprep.subr.mxu0 0.0
    %772 = vmatpush2.msra.mxu0 0.0
    %773 = vmatprep.subr.mxu0 0.0
    %774 = vmatpush2.msra.mxu0 0.0
    %775 = vmatprep.subr.mxu0 0.0
    %776 = vmatpush2.msra.mxu0 0.0
    %777 = vmatprep.subr.mxu0 0.0
    %778 = vmatpush2.msra.mxu0 0.0
    %779 = vmatprep.subr.mxu0 0.0
    %780 = vmatpush2.msra.mxu0 0.0
    %781 = vmatprep.subr.mxu0 0.0
    %782 = vmatpush2.msra.mxu0 0.0
    %783 = vmatprep.subr.mxu0 0.0
    %784 = vmatpush2.msra.mxu0 0.0
    %785 = vmatprep.subr.mxu0 0.0
    %786 = vmatpush2.msra.mxu0 0.0
    %787 = vmatprep.subr.mxu0 0.0
    %788 = vmatpush2.msra.mxu0 0.0
    %789 = vmatprep.subr.mxu0 0.0
    %790 = vmatpush2.msra.mxu0 0.0
    %791 = vmatprep.subr.mxu0 0.0
    %792 = vmatpush2.msra.mxu0 0.0
    %793 = vmatprep.subr.mxu0 0.0
    %794 = vmatpush2.msra.mxu0 0.0
    %795 = vmatprep.subr.mxu0 0.0
    %796 = vmatpush2.msra.mxu0 0.0
    %797 = vmatprep.subr.mxu0 0.0
    %798 = vmatpush2.msra.mxu0 0.0
    %799 = vmatprep.subr.mxu0 0.0
    %800 = vmatpush2.msra.mxu0 0.0
    %801 = vmatprep.mubr.f32.mxu0 0.0
    %802 = vmatmul.mubr.f32.gmra.mxu0 %v727
    %v803 = vpop.f32.mrf.mxu0
    %v804 = vadd.f32 0.0, %v803
    %v805 = vpop.f32.mrf.mxu0
    %v806 = vadd.f32 0.0, %v805
    %807 = vmatprep.mubr.f32.mxu0 0.0
    %808 = vmatmul.mubr.f32.gmra.mxu0 %v729
    %v809 = vpop.f32.mrf.mxu0
    %v810 = vadd.f32 0.0, %v809
    %v811 = vpop.f32.mrf.mxu0
    %v812 = vadd.f32 0.0, %v811
    %813 = vdwg.mxu0
    %v814 = vadd.f32 %v690, %v804
    %v815 = vadd.f32 %v692, %v806
    %v816 = vadd.f32 %v696, %v810
    %v817 = vadd.f32 %v698, %v812
    %s818 = scalar_lea.vmem %s3, 528
    %v819 = vld [vmem:[%s818] sm:$0xff]
    %v820 = vld [vmem:[%s818 + $0x8] sm:$0xff]
    %v821 = vld [vmem:[%s818 + $0x10] sm:$0xff]
    %v822 = vld [vmem:[%s818 + $0x18] sm:$0xff]
    %v823 = vld [vmem:[%s818 + $0x20] sm:$0xff]
    %v824 = vld [vmem:[%s818 + $0x28] sm:$0xff]
    %v825 = vld [vmem:[%s818 + $0x30] sm:$0xff]
    %v826 = vld [vmem:[%s818 + $0x38] sm:$0xff]
    %v827 = vld [vmem:[%s818 + $0x40] sm:$0xff]
    %v828 = vld [vmem:[%s818 + $0x48] sm:$0xff]
    %v829 = vld [vmem:[%s818 + $0x50] sm:$0xff]
    %v830 = vld [vmem:[%s818 + $0x58] sm:$0xff]
    %v831 = vld [vmem:[%s818 + $0x60] sm:$0xff]
    %v832 = vld [vmem:[%s818 + $0x68] sm:$0xff]
    %v833 = vld [vmem:[%s818 + $0x70] sm:$0xff]
    %v834 = vld [vmem:[%s818 + $0x78] sm:$0xff]
    %v835 = vld [vmem:[%s818 + $0x80] sm:$0xff]
    %v836 = vld [vmem:[%s818 + $0x88] sm:$0xff]
    %v837 = vld [vmem:[%s818 + $0x90] sm:$0xff]
    %v838 = vld [vmem:[%s818 + $0x98] sm:$0xff]
    %v839 = vld [vmem:[%s818 + $0xa0] sm:$0xf]
    %v840 = vld [vmem:[%s818 + $0xa8] sm:$0xf]
    %v841 = vrot.slane %v468, 6
    %v842 = vrot.slane %v469, 6
    %v843 = vsel %vm434, %v841, %v842
    %v844 = vsel %vm523, %v843, 0
    %v846 = vsel %vm523, %v842, 0
    %v849 = vsel %vm519, %v839, 0
    %v852 = vsel %vm519, %v840, 0
    %854 = vmatprep.subr.mxu0 0.0
    %855 = vmatpush1.msra.mxu0 0.0
    %856 = vmatprep.subr.mxu0 0.0
    %857 = vmatpush1.msra.mxu0 0.0
    %858 = vmatprep.subr.mxu0 0.0
    %859 = vmatpush1.msra.mxu0 0.0
    %860 = vmatprep.subr.mxu0 0.0
    %861 = vmatpush1.msra.mxu0 0.0
    %862 = vmatprep.subr.mxu0 0.0
    %863 = vmatpush1.msra.mxu0 0.0
    %864 = vmatprep.subr.mxu0 %v852
    %865 = vmatpush1.msra.mxu0 %v849
    %866 = vmatprep.subr.mxu0 %v838
    %867 = vmatpush1.msra.mxu0 %v837
    %868 = vmatprep.subr.mxu0 %v836
    %869 = vmatpush1.msra.mxu0 %v835
    %870 = vmatprep.subr.mxu0 %v834
    %871 = vmatpush1.msra.mxu0 %v833
    %872 = vmatprep.subr.mxu0 %v832
    %873 = vmatpush1.msra.mxu0 %v831
    %874 = vmatprep.subr.mxu0 %v830
    %875 = vmatpush1.msra.mxu0 %v829
    %876 = vmatprep.subr.mxu0 %v828
    %877 = vmatpush1.msra.mxu0 %v827
    %878 = vmatprep.subr.mxu0 %v826
    %879 = vmatpush1.msra.mxu0 %v825
    %880 = vmatprep.subr.mxu0 %v824
    %881 = vmatpush1.msra.mxu0 %v823
    %882 = vmatprep.subr.mxu0 %v822
    %883 = vmatpush1.msra.mxu0 %v821
    %884 = vmatprep.subr.mxu0 %v820
    %885 = vmatpush1.msra.mxu0 %v819
    %886 = vmatprep.subr.mxu0 0.0
    %887 = vmatpush2.msra.mxu0 0.0
    %888 = vmatprep.subr.mxu0 0.0
    %889 = vmatpush2.msra.mxu0 0.0
    %890 = vmatprep.subr.mxu0 0.0
    %891 = vmatpush2.msra.mxu0 0.0
    %892 = vmatprep.subr.mxu0 0.0
    %893 = vmatpush2.msra.mxu0 0.0
    %894 = vmatprep.subr.mxu0 0.0
    %895 = vmatpush2.msra.mxu0 0.0
    %896 = vmatprep.subr.mxu0 0.0
    %897 = vmatpush2.msra.mxu0 0.0
    %898 = vmatprep.subr.mxu0 0.0
    %899 = vmatpush2.msra.mxu0 0.0
    %900 = vmatprep.subr.mxu0 0.0
    %901 = vmatpush2.msra.mxu0 0.0
    %902 = vmatprep.subr.mxu0 0.0
    %903 = vmatpush2.msra.mxu0 0.0
    %904 = vmatprep.subr.mxu0 0.0
    %905 = vmatpush2.msra.mxu0 0.0
    %906 = vmatprep.subr.mxu0 0.0
    %907 = vmatpush2.msra.mxu0 0.0
    %908 = vmatprep.subr.mxu0 0.0
    %909 = vmatpush2.msra.mxu0 0.0
    %910 = vmatprep.subr.mxu0 0.0
    %911 = vmatpush2.msra.mxu0 0.0
    %912 = vmatprep.subr.mxu0 0.0
    %913 = vmatpush2.msra.mxu0 0.0
    %914 = vmatprep.subr.mxu0 0.0
    %915 = vmatpush2.msra.mxu0 0.0
    %916 = vmatprep.subr.mxu0 0.0
    %917 = vmatpush2.msra.mxu0 0.0
    %918 = vmatprep.mubr.f32.mxu0 0.0
    %919 = vmatmul.mubr.f32.gmra.mxu0 %v844
    %v920 = vpop.f32.mrf.mxu0
    %v921 = vadd.f32 0.0, %v920
    %v922 = vpop.f32.mrf.mxu0
    %v923 = vadd.f32 0.0, %v922
    %924 = vmatprep.mubr.f32.mxu0 0.0
    %925 = vmatmul.mubr.f32.gmra.mxu0 %v846
    %v926 = vpop.f32.mrf.mxu0
    %v927 = vadd.f32 0.0, %v926
    %v928 = vpop.f32.mrf.mxu0
    %v929 = vadd.f32 0.0, %v928
    %930 = vdwg.mxu0
    %v931 = vadd.f32 %v814, %v921
    %v932 = vadd.f32 %v815, %v923
    %v933 = vadd.f32 %v816, %v927
    %v934 = vadd.f32 %v817, %v929
    %s935 = scalar_lea.vmem %s3, 704
    %v936 = vld [vmem:[%s935] sm:$0xff]
    %v937 = vld [vmem:[%s935 + $0x8] sm:$0xff]
    %v938 = vld [vmem:[%s935 + $0x10] sm:$0xff]
    %v939 = vld [vmem:[%s935 + $0x18] sm:$0xff]
    %v940 = vld [vmem:[%s935 + $0x20] sm:$0xff]
    %v941 = vld [vmem:[%s935 + $0x28] sm:$0xff]
    %v942 = vld [vmem:[%s935 + $0x30] sm:$0xff]
    %v943 = vld [vmem:[%s935 + $0x38] sm:$0xff]
    %v944 = vld [vmem:[%s935 + $0x40] sm:$0xff]
    %v945 = vld [vmem:[%s935 + $0x48] sm:$0xff]
    %v946 = vld [vmem:[%s935 + $0x50] sm:$0xff]
    %v947 = vld [vmem:[%s935 + $0x58] sm:$0xff]
    %v948 = vld [vmem:[%s935 + $0x60] sm:$0xff]
    %v949 = vld [vmem:[%s935 + $0x68] sm:$0xff]
    %v950 = vld [vmem:[%s935 + $0x70] sm:$0xff]
    %v951 = vld [vmem:[%s935 + $0x78] sm:$0xff]
    %v952 = vld [vmem:[%s935 + $0x80] sm:$0xff]
    %v953 = vld [vmem:[%s935 + $0x88] sm:$0xff]
    %v954 = vld [vmem:[%s935 + $0x90] sm:$0xff]
    %v955 = vld [vmem:[%s935 + $0x98] sm:$0xff]
    %v956 = vld [vmem:[%s935 + $0xa0] sm:$0xf]
    %v957 = vld [vmem:[%s935 + $0xa8] sm:$0xf]
    %v958 = vrot.slane %v452, 4
    %v959 = vrot.slane %v453, 4
    %v960 = vsel %vm519, %v958, %v959
    %v961 = vsel %vm523, %v960, 0
    %v963 = vsel %vm523, %v959, 0
    %v966 = vsel %vm519, %v956, 0
    %v969 = vsel %vm519, %v957, 0
    %971 = vmatprep.subr.mxu0 0.0
    %972 = vmatpush1.msra.mxu0 0.0
    %973 = vmatprep.subr.mxu0 0.0
    %974 = vmatpush1.msra.mxu0 0.0
    %975 = vmatprep.subr.mxu0 0.0
    %976 = vmatpush1.msra.mxu0 0.0
    %977 = vmatprep.subr.mxu0 0.0
    %978 = vmatpush1.msra.mxu0 0.0
    %979 = vmatprep.subr.mxu0 0.0
    %980 = vmatpush1.msra.mxu0 0.0
    %981 = vmatprep.subr.mxu0 %v969
    %982 = vmatpush1.msra.mxu0 %v966
    %983 = vmatprep.subr.mxu0 %v955
    %984 = vmatpush1.msra.mxu0 %v954
    %985 = vmatprep.subr.mxu0 %v953
    %986 = vmatpush1.msra.mxu0 %v952
    %987 = vmatprep.subr.mxu0 %v951
    %988 = vmatpush1.msra.mxu0 %v950
    %989 = vmatprep.subr.mxu0 %v949
    %990 = vmatpush1.msra.mxu0 %v948
    %991 = vmatprep.subr.mxu0 %v947
    %992 = vmatpush1.msra.mxu0 %v946
    %993 = vmatprep.subr.mxu0 %v945
    %994 = vmatpush1.msra.mxu0 %v944
    %995 = vmatprep.subr.mxu0 %v943
    %996 = vmatpush1.msra.mxu0 %v942
    %997 = vmatprep.subr.mxu0 %v941
    %998 = vmatpush1.msra.mxu0 %v940
    %999 = vmatprep.subr.mxu0 %v939
    %1000 = vmatpush1.msra.mxu0 %v938
    %1001 = vmatprep.subr.mxu0 %v937
    %1002 = vmatpush1.msra.mxu0 %v936
    %1003 = vmatprep.subr.mxu0 0.0
    %1004 = vmatpush2.msra.mxu0 0.0
    %1005 = vmatprep.subr.mxu0 0.0
    %1006 = vmatpush2.msra.mxu0 0.0
    %1007 = vmatprep.subr.mxu0 0.0
    %1008 = vmatpush2.msra.mxu0 0.0
    %1009 = vmatprep.subr.mxu0 0.0
    %1010 = vmatpush2.msra.mxu0 0.0
    %1011 = vmatprep.subr.mxu0 0.0
    %1012 = vmatpush2.msra.mxu0 0.0
    %1013 = vmatprep.subr.mxu0 0.0
    %1014 = vmatpush2.msra.mxu0 0.0
    %1015 = vmatprep.subr.mxu0 0.0
    %1016 = vmatpush2.msra.mxu0 0.0
    %1017 = vmatprep.subr.mxu0 0.0
    %1018 = vmatpush2.msra.mxu0 0.0
    %1019 = vmatprep.subr.mxu0 0.0
    %1020 = vmatpush2.msra.mxu0 0.0
    %1021 = vmatprep.subr.mxu0 0.0
    %1022 = vmatpush2.msra.mxu0 0.0
    %1023 = vmatprep.subr.mxu0 0.0
    %1024 = vmatpush2.msra.mxu0 0.0
    %1025 = vmatprep.subr.mxu0 0.0
    %1026 = vmatpush2.msra.mxu0 0.0
    %1027 = vmatprep.subr.mxu0 0.0
    %1028 = vmatpush2.msra.mxu0 0.0
    %1029 = vmatprep.subr.mxu0 0.0
    %1030 = vmatpush2.msra.mxu0 0.0
    %1031 = vmatprep.subr.mxu0 0.0
    %1032 = vmatpush2.msra.mxu0 0.0
    %1033 = vmatprep.subr.mxu0 0.0
    %1034 = vmatpush2.msra.mxu0 0.0
    %1035 = vmatprep.mubr.f32.mxu0 0.0
    %1036 = vmatmul.mubr.f32.gmra.mxu0 %v961
    %v1037 = vpop.f32.mrf.mxu0
    %v1038 = vadd.f32 0.0, %v1037
    %v1039 = vpop.f32.mrf.mxu0
    %v1040 = vadd.f32 0.0, %v1039
    %1041 = vmatprep.mubr.f32.mxu0 0.0
    %1042 = vmatmul.mubr.f32.gmra.mxu0 %v963
    %v1043 = vpop.f32.mrf.mxu0
    %v1044 = vadd.f32 0.0, %v1043
    %v1045 = vpop.f32.mrf.mxu0
    %v1046 = vadd.f32 0.0, %v1045
    %1047 = vdwg.mxu0
    %v1048 = vadd.f32 %v931, %v1038
    %v1049 = vadd.f32 %v932, %v1040
    %v1050 = vadd.f32 %v933, %v1044
    %v1051 = vadd.f32 %v934, %v1046
    %v1052 = vmax.f32 %v1048, %v1049
    %v1053 = vmax.f32 %v1050, %v1051
    %1054 = vmatprep.subr.mxu0 0.0
    %1055 = vmatpush1.msra.mxu0 0.0
    %1056 = vmatprep.subr.mxu0 0.0
    %1057 = vmatpush1.msra.mxu0 0.0
    %1058 = vmatprep.subr.mxu0 0.0
    %1059 = vmatpush1.msra.mxu0 0.0
    %1060 = vmatprep.subr.mxu0 0.0
    %1061 = vmatpush1.msra.mxu0 0.0
    %1062 = vmatprep.subr.mxu0 0.0
    %1063 = vmatpush1.msra.mxu0 0.0
    %1064 = vmatprep.subr.mxu0 %v532
    %1065 = vmatpush1.msra.mxu0 %v529
    %1066 = vmatprep.subr.mxu0 %v514
    %1067 = vmatpush1.msra.mxu0 %v513
    %1068 = vmatprep.subr.mxu0 %v512
    %1069 = vmatpush1.msra.mxu0 %v511
    %1070 = vmatprep.subr.mxu0 %v510
    %1071 = vmatpush1.msra.mxu0 %v509
    %1072 = vmatprep.subr.mxu0 %v508
    %1073 = vmatpush1.msra.mxu0 %v507
    %1074 = vmatprep.subr.mxu0 %v506
    %1075 = vmatpush1.msra.mxu0 %v505
    %1076 = vmatprep.subr.mxu0 %v504
    %1077 = vmatpush1.msra.mxu0 %v503
    %1078 = vmatprep.subr.mxu0 %v502
    %1079 = vmatpush1.msra.mxu0 %v501
    %1080 = vmatprep.subr.mxu0 %v500
    %1081 = vmatpush1.msra.mxu0 %v499
    %1082 = vmatprep.subr.mxu0 %v498
    %1083 = vmatpush1.msra.mxu0 %v497
    %1084 = vmatprep.subr.mxu0 %v496
    %1085 = vmatpush1.msra.mxu0 %v495
    %1086 = vmatprep.subr.mxu0 0.0
    %1087 = vmatpush2.msra.mxu0 0.0
    %1088 = vmatprep.subr.mxu0 0.0
    %1089 = vmatpush2.msra.mxu0 0.0
    %1090 = vmatprep.subr.mxu0 0.0
    %1091 = vmatpush2.msra.mxu0 0.0
    %1092 = vmatprep.subr.mxu0 0.0
    %1093 = vmatpush2.msra.mxu0 0.0
    %1094 = vmatprep.subr.mxu0 0.0
    %1095 = vmatpush2.msra.mxu0 0.0
    %1096 = vmatprep.subr.mxu0 0.0
    %1097 = vmatpush2.msra.mxu0 0.0
    %1098 = vmatprep.subr.mxu0 0.0
    %1099 = vmatpush2.msra.mxu0 0.0
    %1100 = vmatprep.subr.mxu0 0.0
    %1101 = vmatpush2.msra.mxu0 0.0
    %1102 = vmatprep.subr.mxu0 0.0
    %1103 = vmatpush2.msra.mxu0 0.0
    %1104 = vmatprep.subr.mxu0 0.0
    %1105 = vmatpush2.msra.mxu0 0.0
    %1106 = vmatprep.subr.mxu0 0.0
    %1107 = vmatpush2.msra.mxu0 0.0
    %1108 = vmatprep.subr.mxu0 0.0
    %1109 = vmatpush2.msra.mxu0 0.0
    %1110 = vmatprep.subr.mxu0 0.0
    %1111 = vmatpush2.msra.mxu0 0.0
    %1112 = vmatprep.subr.mxu0 0.0
    %1113 = vmatpush2.msra.mxu0 0.0
    %1114 = vmatprep.subr.mxu0 0.0
    %1115 = vmatpush2.msra.mxu0 0.0
    %1116 = vmatprep.subr.mxu0 0.0
    %1117 = vmatpush2.msra.mxu0 0.0
    %1118 = vmatprep.mubr.f32.mxu0 0.0
    %1119 = vmatmul.mubr.f32.gmra.mxu0 %v727
    %v1120 = vpop.f32.mrf.mxu0
    %v1121 = vadd.f32 0.0, %v1120
    %v1122 = vpop.f32.mrf.mxu0
    %v1123 = vadd.f32 0.0, %v1122
    %1124 = vmatprep.mubr.f32.mxu0 0.0
    %1125 = vmatmul.mubr.f32.gmra.mxu0 %v729
    %v1126 = vpop.f32.mrf.mxu0
    %v1127 = vadd.f32 0.0, %v1126
    %v1128 = vpop.f32.mrf.mxu0
    %v1129 = vadd.f32 0.0, %v1128
    %1130 = vdwg.mxu0
    %1131 = vmatprep.subr.mxu0 0.0
    %1132 = vmatpush1.msra.mxu0 0.0
    %1133 = vmatprep.subr.mxu0 0.0
    %1134 = vmatpush1.msra.mxu0 0.0
    %1135 = vmatprep.subr.mxu0 0.0
    %1136 = vmatpush1.msra.mxu0 0.0
    %1137 = vmatprep.subr.mxu0 0.0
    %1138 = vmatpush1.msra.mxu0 0.0
    %1139 = vmatprep.subr.mxu0 0.0
    %1140 = vmatpush1.msra.mxu0 0.0
    %1141 = vmatprep.subr.mxu0 %v621
    %1142 = vmatpush1.msra.mxu0 %v618
    %1143 = vmatprep.subr.mxu0 %v491
    %1144 = vmatpush1.msra.mxu0 %v490
    %1145 = vmatprep.subr.mxu0 %v489
    %1146 = vmatpush1.msra.mxu0 %v488
    %1147 = vmatprep.subr.mxu0 %v487
    %1148 = vmatpush1.msra.mxu0 %v486
    %1149 = vmatprep.subr.mxu0 %v485
    %1150 = vmatpush1.msra.mxu0 %v484
    %1151 = vmatprep.subr.mxu0 %v483
    %1152 = vmatpush1.msra.mxu0 %v482
    %1153 = vmatprep.subr.mxu0 %v481
    %1154 = vmatpush1.msra.mxu0 %v480
    %1155 = vmatprep.subr.mxu0 %v479
    %1156 = vmatpush1.msra.mxu0 %v478
    %1157 = vmatprep.subr.mxu0 %v477
    %1158 = vmatpush1.msra.mxu0 %v476
    %1159 = vmatprep.subr.mxu0 %v475
    %1160 = vmatpush1.msra.mxu0 %v474
    %1161 = vmatprep.subr.mxu0 %v473
    %1162 = vmatpush1.msra.mxu0 %v472
    %1163 = vmatprep.subr.mxu0 0.0
    %1164 = vmatpush2.msra.mxu0 0.0
    %1165 = vmatprep.subr.mxu0 0.0
    %1166 = vmatpush2.msra.mxu0 0.0
    %1167 = vmatprep.subr.mxu0 0.0
    %1168 = vmatpush2.msra.mxu0 0.0
    %1169 = vmatprep.subr.mxu0 0.0
    %1170 = vmatpush2.msra.mxu0 0.0
    %1171 = vmatprep.subr.mxu0 0.0
    %1172 = vmatpush2.msra.mxu0 0.0
    %1173 = vmatprep.subr.mxu0 0.0
    %1174 = vmatpush2.msra.mxu0 0.0
    %1175 = vmatprep.subr.mxu0 0.0
    %1176 = vmatpush2.msra.mxu0 0.0
    %1177 = vmatprep.subr.mxu0 0.0
    %1178 = vmatpush2.msra.mxu0 0.0
    %1179 = vmatprep.subr.mxu0 0.0
    %1180 = vmatpush2.msra.mxu0 0.0
    %1181 = vmatprep.subr.mxu0 0.0
    %1182 = vmatpush2.msra.mxu0 0.0
    %1183 = vmatprep.subr.mxu0 0.0
    %1184 = vmatpush2.msra.mxu0 0.0
    %1185 = vmatprep.subr.mxu0 0.0
    %1186 = vmatpush2.msra.mxu0 0.0
    %1187 = vmatprep.subr.mxu0 0.0
    %1188 = vmatpush2.msra.mxu0 0.0
    %1189 = vmatprep.subr.mxu0 0.0
    %1190 = vmatpush2.msra.mxu0 0.0
    %1191 = vmatprep.subr.mxu0 0.0
    %1192 = vmatpush2.msra.mxu0 0.0
    %1193 = vmatprep.subr.mxu0 0.0
    %1194 = vmatpush2.msra.mxu0 0.0
    %1195 = vmatprep.mubr.f32.mxu0 0.0
    %1196 = vmatmul.mubr.f32.gmra.mxu0 %v524
    %v1197 = vpop.f32.mrf.mxu0
    %v1198 = vadd.f32 %v1121, %v1197
    %v1199 = vpop.f32.mrf.mxu0
    %v1200 = vadd.f32 %v1123, %v1199
    %1201 = vmatprep.mubr.f32.mxu0 0.0
    %1202 = vmatmul.mubr.f32.gmra.mxu0 %v526
    %v1203 = vpop.f32.mrf.mxu0
    %v1204 = vadd.f32 %v1127, %v1203
    %v1205 = vpop.f32.mrf.mxu0
    %v1206 = vadd.f32 %v1129, %v1205
    %1207 = vdwg.mxu0
    %1208 = vmatprep.subr.mxu0 0.0
    %1209 = vmatpush1.msra.mxu0 0.0
    %1210 = vmatprep.subr.mxu0 0.0
    %1211 = vmatpush1.msra.mxu0 0.0
    %1212 = vmatprep.subr.mxu0 0.0
    %1213 = vmatpush1.msra.mxu0 0.0
    %1214 = vmatprep.subr.mxu0 0.0
    %1215 = vmatpush1.msra.mxu0 0.0
    %1216 = vmatprep.subr.mxu0 0.0
    %1217 = vmatpush1.msra.mxu0 0.0
    %1218 = vmatprep.subr.mxu0 %v735
    %1219 = vmatpush1.msra.mxu0 %v732
    %1220 = vmatprep.subr.mxu0 %v720
    %1221 = vmatpush1.msra.mxu0 %v719
    %1222 = vmatprep.subr.mxu0 %v718
    %1223 = vmatpush1.msra.mxu0 %v717
    %1224 = vmatprep.subr.mxu0 %v716
    %1225 = vmatpush1.msra.mxu0 %v715
    %1226 = vmatprep.subr.mxu0 %v714
    %1227 = vmatpush1.msra.mxu0 %v713
    %1228 = vmatprep.subr.mxu0 %v712
    %1229 = vmatpush1.msra.mxu0 %v711
    %1230 = vmatprep.subr.mxu0 %v710
    %1231 = vmatpush1.msra.mxu0 %v709
    %1232 = vmatprep.subr.mxu0 %v708
    %1233 = vmatpush1.msra.mxu0 %v707
    %1234 = vmatprep.subr.mxu0 %v706
    %1235 = vmatpush1.msra.mxu0 %v705
    %1236 = vmatprep.subr.mxu0 %v704
    %1237 = vmatpush1.msra.mxu0 %v703
    %1238 = vmatprep.subr.mxu0 %v702
    %1239 = vmatpush1.msra.mxu0 %v701
    %1240 = vmatprep.subr.mxu0 0.0
    %1241 = vmatpush2.msra.mxu0 0.0
    %1242 = vmatprep.subr.mxu0 0.0
    %1243 = vmatpush2.msra.mxu0 0.0
    %1244 = vmatprep.subr.mxu0 0.0
    %1245 = vmatpush2.msra.mxu0 0.0
    %1246 = vmatprep.subr.mxu0 0.0
    %1247 = vmatpush2.msra.mxu0 0.0
    %1248 = vmatprep.subr.mxu0 0.0
    %1249 = vmatpush2.msra.mxu0 0.0
    %1250 = vmatprep.subr.mxu0 0.0
    %1251 = vmatpush2.msra.mxu0 0.0
    %1252 = vmatprep.subr.mxu0 0.0
    %1253 = vmatpush2.msra.mxu0 0.0
    %1254 = vmatprep.subr.mxu0 0.0
    %1255 = vmatpush2.msra.mxu0 0.0
    %1256 = vmatprep.subr.mxu0 0.0
    %1257 = vmatpush2.msra.mxu0 0.0
    %1258 = vmatprep.subr.mxu0 0.0
    %1259 = vmatpush2.msra.mxu0 0.0
    %1260 = vmatprep.subr.mxu0 0.0
    %1261 = vmatpush2.msra.mxu0 0.0
    %1262 = vmatprep.subr.mxu0 0.0
    %1263 = vmatpush2.msra.mxu0 0.0
    %1264 = vmatprep.subr.mxu0 0.0
    %1265 = vmatpush2.msra.mxu0 0.0
    %1266 = vmatprep.subr.mxu0 0.0
    %1267 = vmatpush2.msra.mxu0 0.0
    %1268 = vmatprep.subr.mxu0 0.0
    %1269 = vmatpush2.msra.mxu0 0.0
    %1270 = vmatprep.subr.mxu0 0.0
    %1271 = vmatpush2.msra.mxu0 0.0
    %1272 = vmatprep.mubr.f32.mxu0 0.0
    %1273 = vmatmul.mubr.f32.gmra.mxu0 %v844
    %v1274 = vpop.f32.mrf.mxu0
    %v1275 = vadd.f32 0.0, %v1274
    %v1276 = vpop.f32.mrf.mxu0
    %v1277 = vadd.f32 0.0, %v1276
    %1278 = vmatprep.mubr.f32.mxu0 0.0
    %1279 = vmatmul.mubr.f32.gmra.mxu0 %v846
    %v1280 = vpop.f32.mrf.mxu0
    %v1281 = vadd.f32 0.0, %v1280
    %v1282 = vpop.f32.mrf.mxu0
    %v1283 = vadd.f32 0.0, %v1282
    %1284 = vdwg.mxu0
    %v1285 = vadd.f32 %v1198, %v1275
    %v1286 = vadd.f32 %v1200, %v1277
    %v1287 = vadd.f32 %v1204, %v1281
    %v1288 = vadd.f32 %v1206, %v1283
    %1289 = vmatprep.subr.mxu0 0.0
    %1290 = vmatpush1.msra.mxu0 0.0
    %1291 = vmatprep.subr.mxu0 0.0
    %1292 = vmatpush1.msra.mxu0 0.0
    %1293 = vmatprep.subr.mxu0 0.0
    %1294 = vmatpush1.msra.mxu0 0.0
    %1295 = vmatprep.subr.mxu0 0.0
    %1296 = vmatpush1.msra.mxu0 0.0
    %1297 = vmatprep.subr.mxu0 0.0
    %1298 = vmatpush1.msra.mxu0 0.0
    %1299 = vmatprep.subr.mxu0 %v852
    %1300 = vmatpush1.msra.mxu0 %v849
    %1301 = vmatprep.subr.mxu0 %v838
    %1302 = vmatpush1.msra.mxu0 %v837
    %1303 = vmatprep.subr.mxu0 %v836
    %1304 = vmatpush1.msra.mxu0 %v835
    %1305 = vmatprep.subr.mxu0 %v834
    %1306 = vmatpush1.msra.mxu0 %v833
    %1307 = vmatprep.subr.mxu0 %v832
    %1308 = vmatpush1.msra.mxu0 %v831
    %1309 = vmatprep.subr.mxu0 %v830
    %1310 = vmatpush1.msra.mxu0 %v829
    %1311 = vmatprep.subr.mxu0 %v828
    %1312 = vmatpush1.msra.mxu0 %v827
    %1313 = vmatprep.subr.mxu0 %v826
    %1314 = vmatpush1.msra.mxu0 %v825
    %1315 = vmatprep.subr.mxu0 %v824
    %1316 = vmatpush1.msra.mxu0 %v823
    %1317 = vmatprep.subr.mxu0 %v822
    %1318 = vmatpush1.msra.mxu0 %v821
    %1319 = vmatprep.subr.mxu0 %v820
    %1320 = vmatpush1.msra.mxu0 %v819
    %1321 = vmatprep.subr.mxu0 0.0
    %1322 = vmatpush2.msra.mxu0 0.0
    %1323 = vmatprep.subr.mxu0 0.0
    %1324 = vmatpush2.msra.mxu0 0.0
    %1325 = vmatprep.subr.mxu0 0.0
    %1326 = vmatpush2.msra.mxu0 0.0
    %1327 = vmatprep.subr.mxu0 0.0
    %1328 = vmatpush2.msra.mxu0 0.0
    %1329 = vmatprep.subr.mxu0 0.0
    %1330 = vmatpush2.msra.mxu0 0.0
    %1331 = vmatprep.subr.mxu0 0.0
    %1332 = vmatpush2.msra.mxu0 0.0
    %1333 = vmatprep.subr.mxu0 0.0
    %1334 = vmatpush2.msra.mxu0 0.0
    %1335 = vmatprep.subr.mxu0 0.0
    %1336 = vmatpush2.msra.mxu0 0.0
    %1337 = vmatprep.subr.mxu0 0.0
    %1338 = vmatpush2.msra.mxu0 0.0
    %1339 = vmatprep.subr.mxu0 0.0
    %1340 = vmatpush2.msra.mxu0 0.0
    %1341 = vmatprep.subr.mxu0 0.0
    %1342 = vmatpush2.msra.mxu0 0.0
    %1343 = vmatprep.subr.mxu0 0.0
    %1344 = vmatpush2.msra.mxu0 0.0
    %1345 = vmatprep.subr.mxu0 0.0
    %1346 = vmatpush2.msra.mxu0 0.0
    %1347 = vmatprep.subr.mxu0 0.0
    %1348 = vmatpush2.msra.mxu0 0.0
    %1349 = vmatprep.subr.mxu0 0.0
    %1350 = vmatpush2.msra.mxu0 0.0
    %1351 = vmatprep.subr.mxu0 0.0
    %1352 = vmatpush2.msra.mxu0 0.0
    %1353 = vmatprep.mubr.f32.mxu0 0.0
    %1354 = vmatmul.mubr.f32.gmra.mxu0 %v961
    %v1355 = vpop.f32.mrf.mxu0
    %v1356 = vadd.f32 0.0, %v1355
    %v1357 = vpop.f32.mrf.mxu0
    %v1358 = vadd.f32 0.0, %v1357
    %1359 = vmatprep.mubr.f32.mxu0 0.0
    %1360 = vmatmul.mubr.f32.gmra.mxu0 %v963
    %v1361 = vpop.f32.mrf.mxu0
    %v1362 = vadd.f32 0.0, %v1361
    %v1363 = vpop.f32.mrf.mxu0
    %v1364 = vadd.f32 0.0, %v1363
    %1365 = vdwg.mxu0
    %v1366 = vadd.f32 %v1285, %v1356
    %v1367 = vadd.f32 %v1286, %v1358
    %v1368 = vadd.f32 %v1287, %v1362
    %v1369 = vadd.f32 %v1288, %v1364
    %v1370 = vsel %vm523, %v469, 0
    %v1373 = vsel %vm523, %v470, 0
    %1375 = vmatprep.subr.mxu0 0.0
    %1376 = vmatpush1.msra.mxu0 0.0
    %1377 = vmatprep.subr.mxu0 0.0
    %1378 = vmatpush1.msra.mxu0 0.0
    %1379 = vmatprep.subr.mxu0 0.0
    %1380 = vmatpush1.msra.mxu0 0.0
    %1381 = vmatprep.subr.mxu0 0.0
    %1382 = vmatpush1.msra.mxu0 0.0
    %1383 = vmatprep.subr.mxu0 0.0
    %1384 = vmatpush1.msra.mxu0 0.0
    %1385 = vmatprep.subr.mxu0 %v969
    %1386 = vmatpush1.msra.mxu0 %v966
    %1387 = vmatprep.subr.mxu0 %v955
    %1388 = vmatpush1.msra.mxu0 %v954
    %1389 = vmatprep.subr.mxu0 %v953
    %1390 = vmatpush1.msra.mxu0 %v952
    %1391 = vmatprep.subr.mxu0 %v951
    %1392 = vmatpush1.msra.mxu0 %v950
    %1393 = vmatprep.subr.mxu0 %v949
    %1394 = vmatpush1.msra.mxu0 %v948
    %1395 = vmatprep.subr.mxu0 %v947
    %1396 = vmatpush1.msra.mxu0 %v946
    %1397 = vmatprep.subr.mxu0 %v945
    %1398 = vmatpush1.msra.mxu0 %v944
    %1399 = vmatprep.subr.mxu0 %v943
    %1400 = vmatpush1.msra.mxu0 %v942
    %1401 = vmatprep.subr.mxu0 %v941
    %1402 = vmatpush1.msra.mxu0 %v940
    %1403 = vmatprep.subr.mxu0 %v939
    %1404 = vmatpush1.msra.mxu0 %v938
    %1405 = vmatprep.subr.mxu0 %v937
    %1406 = vmatpush1.msra.mxu0 %v936
    %1407 = vmatprep.subr.mxu0 0.0
    %1408 = vmatpush2.msra.mxu0 0.0
    %1409 = vmatprep.subr.mxu0 0.0
    %1410 = vmatpush2.msra.mxu0 0.0
    %1411 = vmatprep.subr.mxu0 0.0
    %1412 = vmatpush2.msra.mxu0 0.0
    %1413 = vmatprep.subr.mxu0 0.0
    %1414 = vmatpush2.msra.mxu0 0.0
    %1415 = vmatprep.subr.mxu0 0.0
    %1416 = vmatpush2.msra.mxu0 0.0
    %1417 = vmatprep.subr.mxu0 0.0
    %1418 = vmatpush2.msra.mxu0 0.0
    %1419 = vmatprep.subr.mxu0 0.0
    %1420 = vmatpush2.msra.mxu0 0.0
    %1421 = vmatprep.subr.mxu0 0.0
    %1422 = vmatpush2.msra.mxu0 0.0
    %1423 = vmatprep.subr.mxu0 0.0
    %1424 = vmatpush2.msra.mxu0 0.0
    %1425 = vmatprep.subr.mxu0 0.0
    %1426 = vmatpush2.msra.mxu0 0.0
    %1427 = vmatprep.subr.mxu0 0.0
    %1428 = vmatpush2.msra.mxu0 0.0
    %1429 = vmatprep.subr.mxu0 0.0
    %1430 = vmatpush2.msra.mxu0 0.0
    %1431 = vmatprep.subr.mxu0 0.0
    %1432 = vmatpush2.msra.mxu0 0.0
    %1433 = vmatprep.subr.mxu0 0.0
    %1434 = vmatpush2.msra.mxu0 0.0
    %1435 = vmatprep.subr.mxu0 0.0
    %1436 = vmatpush2.msra.mxu0 0.0
    %1437 = vmatprep.subr.mxu0 0.0
    %1438 = vmatpush2.msra.mxu0 0.0
    %1439 = vmatprep.mubr.f32.mxu0 0.0
    %1440 = vmatmul.mubr.f32.gmra.mxu0 %v1370
    %v1441 = vpop.f32.mrf.mxu0
    %v1442 = vadd.f32 0.0, %v1441
    %v1443 = vpop.f32.mrf.mxu0
    %v1444 = vadd.f32 0.0, %v1443
    %1445 = vmatprep.mubr.f32.mxu0 0.0
    %1446 = vmatmul.mubr.f32.gmra.mxu0 %v1373
    %v1447 = vpop.f32.mrf.mxu0
    %v1448 = vadd.f32 0.0, %v1447
    %v1449 = vpop.f32.mrf.mxu0
    %v1450 = vadd.f32 0.0, %v1449
    %1451 = vdwg.mxu0
    %v1452 = vadd.f32 %v1366, %v1442
    %v1453 = vadd.f32 %v1367, %v1444
    %v1454 = vadd.f32 %v1368, %v1448
    %v1455 = vadd.f32 %v1369, %v1450
    %v1456 = vmax.f32 %v1452, %v1453
    %v1457 = vmax.f32 %v1454, %v1455
    %v1458 = vmax.f32 %v1052, %v1456
    %v1459 = vmax.f32 %v1053, %v1457
    %v1461 = vlaneseq
    %v1462 = vshrl.u32 %v1461, 7
    %v1463 = vsub.s32 0, %v1462
    %v1464 = vrot.slane %v471, %v1463
    %v1466 = vadd.f32 %v1458, %v1464
    %v1467 = vadd.f32 %v1459, %v1464
    %v1468 = vtanh.pop %v1466
    %v1469 = vtanh.pop %v1467
    %v1470 = vld [vmem:[%s5] sm:$0xff]
    %v1471 = vld [vmem:[%s5 + $0x8] sm:$0xff]
    %v1472 = vld [vmem:[%s5 + $0x10] sm:$0xff]
    %v1473 = vld [vmem:[%s5 + $0x18] sm:$0xff]
    %v1474 = vld [vmem:[%s5 + $0x20] sm:$0xff]
    %v1475 = vld [vmem:[%s5 + $0x28] sm:$0xff]
    %v1476 = vld [vmem:[%s5 + $0x30] sm:$0xff]
    %v1477 = vld [vmem:[%s5 + $0x38] sm:$0xff]
    %v1478 = vld [vmem:[%s5 + $0x40] sm:$0xff]
    %v1479 = vld [vmem:[%s5 + $0x48] sm:$0xff]
    %s1480 = scalar_lea.vmem %s5, 80
    %v1481 = vld [vmem:[%s1480] sm:$0xff]
    %v1482 = vld [vmem:[%s1480 + $0x8] sm:$0xff]
    %v1483 = vld [vmem:[%s1480 + $0x10] sm:$0xff]
    %v1484 = vld [vmem:[%s1480 + $0x18] sm:$0xff]
    %v1485 = vld [vmem:[%s1480 + $0x20] sm:$0xff]
    %v1486 = vld [vmem:[%s1480 + $0x28] sm:$0xff]
    %v1487 = vld [vmem:[%s1480 + $0x30] sm:$0xff]
    %v1488 = vld [vmem:[%s1480 + $0x38] sm:$0xff]
    %v1489 = vld [vmem:[%s1480 + $0x40] sm:$0xff]
    %v1490 = vld [vmem:[%s1480 + $0x48] sm:$0xff]
    %v1492 = vrot.slane %v1468, 2
    %vm1493 = vcmask 654336
    %v1494 = vsel %vm1493, %v1492, 0
    %1496 = vmatprep.subr.mxu0 0.0
    %1497 = vmatpush1.msra.mxu0 0.0
    %1498 = vmatprep.subr.mxu0 0.0
    %1499 = vmatpush1.msra.mxu0 0.0
    %1500 = vmatprep.subr.mxu0 0.0
    %1501 = vmatpush1.msra.mxu0 0.0
    %1502 = vmatprep.subr.mxu0 0.0
    %1503 = vmatpush1.msra.mxu0 0.0
    %1504 = vmatprep.subr.mxu0 0.0
    %1505 = vmatpush1.msra.mxu0 0.0
    %1506 = vmatprep.subr.mxu0 0.0
    %1507 = vmatpush1.msra.mxu0 0.0
    %1508 = vmatprep.subr.mxu0 0.0
    %1509 = vmatpush1.msra.mxu0 %v1490
    %1510 = vmatprep.subr.mxu0 0.0
    %1511 = vmatpush1.msra.mxu0 %v1489
    %1512 = vmatprep.subr.mxu0 0.0
    %1513 = vmatpush1.msra.mxu0 %v1488
    %1514 = vmatprep.subr.mxu0 0.0
    %1515 = vmatpush1.msra.mxu0 %v1487
    %1516 = vmatprep.subr.mxu0 0.0
    %1517 = vmatpush1.msra.mxu0 %v1486
    %1518 = vmatprep.subr.mxu0 0.0
    %1519 = vmatpush1.msra.mxu0 %v1485
    %1520 = vmatprep.subr.mxu0 0.0
    %1521 = vmatpush1.msra.mxu0 %v1484
    %1522 = vmatprep.subr.mxu0 0.0
    %1523 = vmatpush1.msra.mxu0 %v1483
    %1524 = vmatprep.subr.mxu0 0.0
    %1525 = vmatpush1.msra.mxu0 %v1482
    %1526 = vmatprep.subr.mxu0 0.0
    %1527 = vmatpush1.msra.mxu0 %v1481
    %1528 = vmatprep.subr.mxu0 0.0
    %1529 = vmatpush2.msra.mxu0 0.0
    %1530 = vmatprep.subr.mxu0 0.0
    %1531 = vmatpush2.msra.mxu0 0.0
    %1532 = vmatprep.subr.mxu0 0.0
    %1533 = vmatpush2.msra.mxu0 0.0
    %1534 = vmatprep.subr.mxu0 0.0
    %1535 = vmatpush2.msra.mxu0 0.0
    %1536 = vmatprep.subr.mxu0 0.0
    %1537 = vmatpush2.msra.mxu0 0.0
    %1538 = vmatprep.subr.mxu0 0.0
    %1539 = vmatpush2.msra.mxu0 0.0
    %1540 = vmatprep.subr.mxu0 0.0
    %1541 = vmatpush2.msra.mxu0 0.0
    %1542 = vmatprep.subr.mxu0 0.0
    %1543 = vmatpush2.msra.mxu0 0.0
    %1544 = vmatprep.subr.mxu0 0.0
    %1545 = vmatpush2.msra.mxu0 0.0
    %1546 = vmatprep.subr.mxu0 0.0
    %1547 = vmatpush2.msra.mxu0 0.0
    %1548 = vmatprep.subr.mxu0 0.0
    %1549 = vmatpush2.msra.mxu0 0.0
    %1550 = vmatprep.subr.mxu0 0.0
    %1551 = vmatpush2.msra.mxu0 0.0
    %1552 = vmatprep.subr.mxu0 0.0
    %1553 = vmatpush2.msra.mxu0 0.0
    %1554 = vmatprep.subr.mxu0 0.0
    %1555 = vmatpush2.msra.mxu0 0.0
    %1556 = vmatprep.subr.mxu0 0.0
    %1557 = vmatpush2.msra.mxu0 0.0
    %1558 = vmatprep.subr.mxu0 0.0
    %1559 = vmatpush2.msra.mxu0 0.0
    %1560 = vmatprep.mubr.f32.mxu0 0.0
    %1561 = vmatmul.mubr.f32.gmra.mxu0 %v1494
    %v1562 = vpop.f32.mrf.mxu0
    %v1563 = vadd.f32 0.0, %v1562
    %v1564 = vpop.f32.mrf.mxu0
    %1565 = vdwg.mxu0
    %v1566 = vsel %vm1493, %v1468, 0
    %1568 = vmatprep.subr.mxu0 0.0
    %1569 = vmatpush1.msra.mxu0 0.0
    %1570 = vmatprep.subr.mxu0 0.0
    %1571 = vmatpush1.msra.mxu0 0.0
    %1572 = vmatprep.subr.mxu0 0.0
    %1573 = vmatpush1.msra.mxu0 0.0
    %1574 = vmatprep.subr.mxu0 0.0
    %1575 = vmatpush1.msra.mxu0 0.0
    %1576 = vmatprep.subr.mxu0 0.0
    %1577 = vmatpush1.msra.mxu0 0.0
    %1578 = vmatprep.subr.mxu0 0.0
    %1579 = vmatpush1.msra.mxu0 0.0
    %1580 = vmatprep.subr.mxu0 0.0
    %1581 = vmatpush1.msra.mxu0 %v1479
    %1582 = vmatprep.subr.mxu0 0.0
    %1583 = vmatpush1.msra.mxu0 %v1478
    %1584 = vmatprep.subr.mxu0 0.0
    %1585 = vmatpush1.msra.mxu0 %v1477
    %1586 = vmatprep.subr.mxu0 0.0
    %1587 = vmatpush1.msra.mxu0 %v1476
    %1588 = vmatprep.subr.mxu0 0.0
    %1589 = vmatpush1.msra.mxu0 %v1475
    %1590 = vmatprep.subr.mxu0 0.0
    %1591 = vmatpush1.msra.mxu0 %v1474
    %1592 = vmatprep.subr.mxu0 0.0
    %1593 = vmatpush1.msra.mxu0 %v1473
    %1594 = vmatprep.subr.mxu0 0.0
    %1595 = vmatpush1.msra.mxu0 %v1472
    %1596 = vmatprep.subr.mxu0 0.0
    %1597 = vmatpush1.msra.mxu0 %v1471
    %1598 = vmatprep.subr.mxu0 0.0
    %1599 = vmatpush1.msra.mxu0 %v1470
    %1600 = vmatprep.subr.mxu0 0.0
    %1601 = vmatpush2.msra.mxu0 0.0
    %1602 = vmatprep.subr.mxu0 0.0
    %1603 = vmatpush2.msra.mxu0 0.0
    %1604 = vmatprep.subr.mxu0 0.0
    %1605 = vmatpush2.msra.mxu0 0.0
    %1606 = vmatprep.subr.mxu0 0.0
    %1607 = vmatpush2.msra.mxu0 0.0
    %1608 = vmatprep.subr.mxu0 0.0
    %1609 = vmatpush2.msra.mxu0 0.0
    %1610 = vmatprep.subr.mxu0 0.0
    %1611 = vmatpush2.msra.mxu0 0.0
    %1612 = vmatprep.subr.mxu0 0.0
    %1613 = vmatpush2.msra.mxu0 0.0
    %1614 = vmatprep.subr.mxu0 0.0
    %1615 = vmatpush2.msra.mxu0 0.0
    %1616 = vmatprep.subr.mxu0 0.0
    %1617 = vmatpush2.msra.mxu0 0.0
    %1618 = vmatprep.subr.mxu0 0.0
    %1619 = vmatpush2.msra.mxu0 0.0
    %1620 = vmatprep.subr.mxu0 0.0
    %1621 = vmatpush2.msra.mxu0 0.0
    %1622 = vmatprep.subr.mxu0 0.0
    %1623 = vmatpush2.msra.mxu0 0.0
    %1624 = vmatprep.subr.mxu0 0.0
    %1625 = vmatpush2.msra.mxu0 0.0
    %1626 = vmatprep.subr.mxu0 0.0
    %1627 = vmatpush2.msra.mxu0 0.0
    %1628 = vmatprep.subr.mxu0 0.0
    %1629 = vmatpush2.msra.mxu0 0.0
    %1630 = vmatprep.subr.mxu0 0.0
    %1631 = vmatpush2.msra.mxu0 0.0
    %1632 = vmatprep.mubr.f32.mxu0 0.0
    %1633 = vmatmul.mubr.f32.gmra.mxu0 %v1566
    %v1634 = vpop.f32.mrf.mxu0
    %v1635 = vadd.f32 %v1563, %v1634
    %v1636 = vpop.f32.mrf.mxu0
    %1637 = vdwg.mxu0
    %s1638 = scalar_lea.vmem %s5, 160
    %v1639 = vld [vmem:[%s1638] sm:$0xff]
    %v1640 = vld [vmem:[%s1638 + $0x8] sm:$0xff]
    %v1641 = vld [vmem:[%s1638 + $0x10] sm:$0xff]
    %v1642 = vld [vmem:[%s1638 + $0x18] sm:$0xff]
    %v1643 = vld [vmem:[%s1638 + $0x20] sm:$0xff]
    %v1644 = vld [vmem:[%s1638 + $0x28] sm:$0xff]
    %v1645 = vld [vmem:[%s1638 + $0x30] sm:$0xff]
    %v1646 = vld [vmem:[%s1638 + $0x38] sm:$0xff]
    %v1647 = vld [vmem:[%s1638 + $0x40] sm:$0xff]
    %v1648 = vld [vmem:[%s1638 + $0x48] sm:$0xff]
    %v1649 = vrot.slane %v1468, 4
    %v1650 = vsel %vm1493, %v1649, 0
    %1652 = vmatprep.subr.mxu0 0.0
    %1653 = vmatpush1.msra.mxu0 0.0
    %1654 = vmatprep.subr.mxu0 0.0
    %1655 = vmatpush1.msra.mxu0 0.0
    %1656 = vmatprep.subr.mxu0 0.0
    %1657 = vmatpush1.msra.mxu0 0.0
    %1658 = vmatprep.subr.mxu0 0.0
    %1659 = vmatpush1.msra.mxu0 0.0
    %1660 = vmatprep.subr.mxu0 0.0
    %1661 = vmatpush1.msra.mxu0 0.0
    %1662 = vmatprep.subr.mxu0 0.0
    %1663 = vmatpush1.msra.mxu0 0.0
    %1664 = vmatprep.subr.mxu0 0.0
    %1665 = vmatpush1.msra.mxu0 %v1648
    %1666 = vmatprep.subr.mxu0 0.0
    %1667 = vmatpush1.msra.mxu0 %v1647
    %1668 = vmatprep.subr.mxu0 0.0
    %1669 = vmatpush1.msra.mxu0 %v1646
    %1670 = vmatprep.subr.mxu0 0.0
    %1671 = vmatpush1.msra.mxu0 %v1645
    %1672 = vmatprep.subr.mxu0 0.0
    %1673 = vmatpush1.msra.mxu0 %v1644
    %1674 = vmatprep.subr.mxu0 0.0
    %1675 = vmatpush1.msra.mxu0 %v1643
    %1676 = vmatprep.subr.mxu0 0.0
    %1677 = vmatpush1.msra.mxu0 %v1642
    %1678 = vmatprep.subr.mxu0 0.0
    %1679 = vmatpush1.msra.mxu0 %v1641
    %1680 = vmatprep.subr.mxu0 0.0
    %1681 = vmatpush1.msra.mxu0 %v1640
    %1682 = vmatprep.subr.mxu0 0.0
    %1683 = vmatpush1.msra.mxu0 %v1639
    %1684 = vmatprep.subr.mxu0 0.0
    %1685 = vmatpush2.msra.mxu0 0.0
    %1686 = vmatprep.subr.mxu0 0.0
    %1687 = vmatpush2.msra.mxu0 0.0
    %1688 = vmatprep.subr.mxu0 0.0
    %1689 = vmatpush2.msra.mxu0 0.0
    %1690 = vmatprep.subr.mxu0 0.0
    %1691 = vmatpush2.msra.mxu0 0.0
    %1692 = vmatprep.subr.mxu0 0.0
    %1693 = vmatpush2.msra.mxu0 0.0
    %1694 = vmatprep.subr.mxu0 0.0
    %1695 = vmatpush2.msra.mxu0 0.0
    %1696 = vmatprep.subr.mxu0 0.0
    %1697 = vmatpush2.msra.mxu0 0.0
    %1698 = vmatprep.subr.mxu0 0.0
    %1699 = vmatpush2.msra.mxu0 0.0
    %1700 = vmatprep.subr.mxu0 0.0
    %1701 = vmatpush2.msra.mxu0 0.0
    %1702 = vmatprep.subr.mxu0 0.0
    %1703 = vmatpush2.msra.mxu0 0.0
    %1704 = vmatprep.subr.mxu0 0.0
    %1705 = vmatpush2.msra.mxu0 0.0
    %1706 = vmatprep.subr.mxu0 0.0
    %1707 = vmatpush2.msra.mxu0 0.0
    %1708 = vmatprep.subr.mxu0 0.0
    %1709 = vmatpush2.msra.mxu0 0.0
    %1710 = vmatprep.subr.mxu0 0.0
    %1711 = vmatpush2.msra.mxu0 0.0
    %1712 = vmatprep.subr.mxu0 0.0
    %1713 = vmatpush2.msra.mxu0 0.0
    %1714 = vmatprep.subr.mxu0 0.0
    %1715 = vmatpush2.msra.mxu0 0.0
    %1716 = vmatprep.mubr.f32.mxu0 0.0
    %1717 = vmatmul.mubr.f32.gmra.mxu0 %v1650
    %v1718 = vpop.f32.mrf.mxu0
    %v1719 = vadd.f32 0.0, %v1718
    %v1720 = vpop.f32.mrf.mxu0
    %1721 = vdwg.mxu0
    %v1722 = vadd.f32 %v1635, %v1719
    %s1723 = scalar_lea.vmem %s5, 240
    %v1724 = vld [vmem:[%s1723] sm:$0xff]
    %v1725 = vld [vmem:[%s1723 + $0x8] sm:$0xff]
    %v1726 = vld [vmem:[%s1723 + $0x10] sm:$0xff]
    %v1727 = vld [vmem:[%s1723 + $0x18] sm:$0xff]
    %v1728 = vld [vmem:[%s1723 + $0x20] sm:$0xff]
    %v1729 = vld [vmem:[%s1723 + $0x28] sm:$0xff]
    %v1730 = vld [vmem:[%s1723 + $0x30] sm:$0xff]
    %v1731 = vld [vmem:[%s1723 + $0x38] sm:$0xff]
    %v1732 = vld [vmem:[%s1723 + $0x40] sm:$0xff]
    %v1733 = vld [vmem:[%s1723 + $0x48] sm:$0xff]
    %v1734 = vrot.slane %v1468, 6
    %v1735 = vsel %vm1493, %v1734, 0
    %1737 = vmatprep.subr.mxu0 0.0
    %1738 = vmatpush1.msra.mxu0 0.0
    %1739 = vmatprep.subr.mxu0 0.0
    %1740 = vmatpush1.msra.mxu0 0.0
    %1741 = vmatprep.subr.mxu0 0.0
    %1742 = vmatpush1.msra.mxu0 0.0
    %1743 = vmatprep.subr.mxu0 0.0
    %1744 = vmatpush1.msra.mxu0 0.0
    %1745 = vmatprep.subr.mxu0 0.0
    %1746 = vmatpush1.msra.mxu0 0.0
    %1747 = vmatprep.subr.mxu0 0.0
    %1748 = vmatpush1.msra.mxu0 0.0
    %1749 = vmatprep.subr.mxu0 0.0
    %1750 = vmatpush1.msra.mxu0 %v1733
    %1751 = vmatprep.subr.mxu0 0.0
    %1752 = vmatpush1.msra.mxu0 %v1732
    %1753 = vmatprep.subr.mxu0 0.0
    %1754 = vmatpush1.msra.mxu0 %v1731
    %1755 = vmatprep.subr.mxu0 0.0
    %1756 = vmatpush1.msra.mxu0 %v1730
    %1757 = vmatprep.subr.mxu0 0.0
    %1758 = vmatpush1.msra.mxu0 %v1729
    %1759 = vmatprep.subr.mxu0 0.0
    %1760 = vmatpush1.msra.mxu0 %v1728
    %1761 = vmatprep.subr.mxu0 0.0
    %1762 = vmatpush1.msra.mxu0 %v1727
    %1763 = vmatprep.subr.mxu0 0.0
    %1764 = vmatpush1.msra.mxu0 %v1726
    %1765 = vmatprep.subr.mxu0 0.0
    %1766 = vmatpush1.msra.mxu0 %v1725
    %1767 = vmatprep.subr.mxu0 0.0
    %1768 = vmatpush1.msra.mxu0 %v1724
    %1769 = vmatprep.subr.mxu0 0.0
    %1770 = vmatpush2.msra.mxu0 0.0
    %1771 = vmatprep.subr.mxu0 0.0
    %1772 = vmatpush2.msra.mxu0 0.0
    %1773 = vmatprep.subr.mxu0 0.0
    %1774 = vmatpush2.msra.mxu0 0.0
    %1775 = vmatprep.subr.mxu0 0.0
    %1776 = vmatpush2.msra.mxu0 0.0
    %1777 = vmatprep.subr.mxu0 0.0
    %1778 = vmatpush2.msra.mxu0 0.0
    %1779 = vmatprep.subr.mxu0 0.0
    %1780 = vmatpush2.msra.mxu0 0.0
    %1781 = vmatprep.subr.mxu0 0.0
    %1782 = vmatpush2.msra.mxu0 0.0
    %1783 = vmatprep.subr.mxu0 0.0
    %1784 = vmatpush2.msra.mxu0 0.0
    %1785 = vmatprep.subr.mxu0 0.0
    %1786 = vmatpush2.msra.mxu0 0.0
    %1787 = vmatprep.subr.mxu0 0.0
    %1788 = vmatpush2.msra.mxu0 0.0
    %1789 = vmatprep.subr.mxu0 0.0
    %1790 = vmatpush2.msra.mxu0 0.0
    %1791 = vmatprep.subr.mxu0 0.0
    %1792 = vmatpush2.msra.mxu0 0.0
    %1793 = vmatprep.subr.mxu0 0.0
    %1794 = vmatpush2.msra.mxu0 0.0
    %1795 = vmatprep.subr.mxu0 0.0
    %1796 = vmatpush2.msra.mxu0 0.0
    %1797 = vmatprep.subr.mxu0 0.0
    %1798 = vmatpush2.msra.mxu0 0.0
    %1799 = vmatprep.subr.mxu0 0.0
    %1800 = vmatpush2.msra.mxu0 0.0
    %1801 = vmatprep.mubr.f32.mxu0 0.0
    %1802 = vmatmul.mubr.f32.gmra.mxu0 %v1735
    %v1803 = vpop.f32.mrf.mxu0
    %v1804 = vadd.f32 0.0, %v1803
    %v1805 = vpop.f32.mrf.mxu0
    %1806 = vdwg.mxu0
    %v1807 = vadd.f32 %v1722, %v1804
    %s1808 = scalar_lea.vmem %s5, 320
    %v1809 = vld [vmem:[%s1808] sm:$0xff]
    %v1810 = vld [vmem:[%s1808 + $0x8] sm:$0xff]
    %v1811 = vld [vmem:[%s1808 + $0x10] sm:$0xff]
    %v1812 = vld [vmem:[%s1808 + $0x18] sm:$0xff]
    %v1813 = vld [vmem:[%s1808 + $0x20] sm:$0xff]
    %v1814 = vld [vmem:[%s1808 + $0x28] sm:$0xff]
    %v1815 = vld [vmem:[%s1808 + $0x30] sm:$0xff]
    %v1816 = vld [vmem:[%s1808 + $0x38] sm:$0xff]
    %v1817 = vld [vmem:[%s1808 + $0x40] sm:$0xff]
    %v1818 = vld [vmem:[%s1808 + $0x48] sm:$0xff]
    %v1820 = vsel %vm1493, %v1469, 0
    %1822 = vmatprep.subr.mxu0 0.0
    %1823 = vmatpush1.msra.mxu0 0.0
    %1824 = vmatprep.subr.mxu0 0.0
    %1825 = vmatpush1.msra.mxu0 0.0
    %1826 = vmatprep.subr.mxu0 0.0
    %1827 = vmatpush1.msra.mxu0 0.0
    %1828 = vmatprep.subr.mxu0 0.0
    %1829 = vmatpush1.msra.mxu0 0.0
    %1830 = vmatprep.subr.mxu0 0.0
    %1831 = vmatpush1.msra.mxu0 0.0
    %1832 = vmatprep.subr.mxu0 0.0
    %1833 = vmatpush1.msra.mxu0 0.0
    %1834 = vmatprep.subr.mxu0 0.0
    %1835 = vmatpush1.msra.mxu0 %v1818
    %1836 = vmatprep.subr.mxu0 0.0
    %1837 = vmatpush1.msra.mxu0 %v1817
    %1838 = vmatprep.subr.mxu0 0.0
    %1839 = vmatpush1.msra.mxu0 %v1816
    %1840 = vmatprep.subr.mxu0 0.0
    %1841 = vmatpush1.msra.mxu0 %v1815
    %1842 = vmatprep.subr.mxu0 0.0
    %1843 = vmatpush1.msra.mxu0 %v1814
    %1844 = vmatprep.subr.mxu0 0.0
    %1845 = vmatpush1.msra.mxu0 %v1813
    %1846 = vmatprep.subr.mxu0 0.0
    %1847 = vmatpush1.msra.mxu0 %v1812
    %1848 = vmatprep.subr.mxu0 0.0
    %1849 = vmatpush1.msra.mxu0 %v1811
    %1850 = vmatprep.subr.mxu0 0.0
    %1851 = vmatpush1.msra.mxu0 %v1810
    %1852 = vmatprep.subr.mxu0 0.0
    %1853 = vmatpush1.msra.mxu0 %v1809
    %1854 = vmatprep.subr.mxu0 0.0
    %1855 = vmatpush2.msra.mxu0 0.0
    %1856 = vmatprep.subr.mxu0 0.0
    %1857 = vmatpush2.msra.mxu0 0.0
    %1858 = vmatprep.subr.mxu0 0.0
    %1859 = vmatpush2.msra.mxu0 0.0
    %1860 = vmatprep.subr.mxu0 0.0
    %1861 = vmatpush2.msra.mxu0 0.0
    %1862 = vmatprep.subr.mxu0 0.0
    %1863 = vmatpush2.msra.mxu0 0.0
    %1864 = vmatprep.subr.mxu0 0.0
    %1865 = vmatpush2.msra.mxu0 0.0
    %1866 = vmatprep.subr.mxu0 0.0
    %1867 = vmatpush2.msra.mxu0 0.0
    %1868 = vmatprep.subr.mxu0 0.0
    %1869 = vmatpush2.msra.mxu0 0.0
    %1870 = vmatprep.subr.mxu0 0.0
    %1871 = vmatpush2.msra.mxu0 0.0
    %1872 = vmatprep.subr.mxu0 0.0
    %1873 = vmatpush2.msra.mxu0 0.0
    %1874 = vmatprep.subr.mxu0 0.0
    %1875 = vmatpush2.msra.mxu0 0.0
    %1876 = vmatprep.subr.mxu0 0.0
    %1877 = vmatpush2.msra.mxu0 0.0
    %1878 = vmatprep.subr.mxu0 0.0
    %1879 = vmatpush2.msra.mxu0 0.0
    %1880 = vmatprep.subr.mxu0 0.0
    %1881 = vmatpush2.msra.mxu0 0.0
    %1882 = vmatprep.subr.mxu0 0.0
    %1883 = vmatpush2.msra.mxu0 0.0
    %1884 = vmatprep.subr.mxu0 0.0
    %1885 = vmatpush2.msra.mxu0 0.0
    %1886 = vmatprep.mubr.f32.mxu0 0.0
    %1887 = vmatmul.mubr.f32.gmra.mxu0 %v1820
    %v1888 = vpop.f32.mrf.mxu0
    %v1889 = vadd.f32 0.0, %v1888
    %v1890 = vpop.f32.mrf.mxu0
    %1891 = vdwg.mxu0
    %v1892 = vadd.f32 %v1807, %v1889
    %v1893 = vld [vmem:[%s6] sm:$0x1]
    %v1895 = vlaneseq
    %v1896 = vshrl.u32 %v1895, 7
    %v1897 = vsub.s32 0, %v1896
    %v1898 = vrot.slane %v1893, %v1897
    %v1900 = vadd.f32 %v1892, %v1898
    %v1901 = vtanh.pop %v1900
    %v1902 = vld [vmem:[%s7] sm:$0xff]
    %v1903 = vld [vmem:[%s7 + $0x8] sm:$0xff]
    %v1904 = vld [vmem:[%s7 + $0x10] sm:$0xff]
    %v1905 = vld [vmem:[%s7 + $0x18] sm:$0xff]
    %v1906 = vld [vmem:[%s7 + $0x20] sm:$0xff]
    %v1907 = vld [vmem:[%s7 + $0x28] sm:$0xff]
    %v1908 = vld [vmem:[%s7 + $0x30] sm:$0xff]
    %v1909 = vld [vmem:[%s7 + $0x38] sm:$0xff]
    %v1910 = vld [vmem:[%s7 + $0x40] sm:$0xff]
    %v1911 = vld [vmem:[%s7 + $0x48] sm:$0xff]
    %v1912 = vld [vmem:[%s7 + $0x50] sm:$0xff]
    %v1913 = vld [vmem:[%s7 + $0x58] sm:$0xff]
    %v1914 = vld [vmem:[%s7 + $0x60] sm:$0xff]
    %v1915 = vld [vmem:[%s7 + $0x68] sm:$0xff]
    %v1916 = vld [vmem:[%s7 + $0x70] sm:$0xff]
    %v1917 = vld [vmem:[%s8] sm:$0x1]
    %v1919 = vlaneseq
    %v1920 = vshrl.u32 %v1919, 7
    %v1921 = vsub.s32 0, %v1920
    %v1922 = vrot.slane %v1917, %v1921
    %vm1924 = vcmask 982016
    %v1926 = vsel %vm1924, %v1901, 0
    %1928 = vmatprep.subr.mxu0 0.0
    %1929 = vmatpush1.msra.mxu0 0.0
    %1930 = vmatprep.subr.mxu0 0.0
    %1931 = vmatpush1.msra.mxu0 %v1916
    %1932 = vmatprep.subr.mxu0 0.0
    %1933 = vmatpush1.msra.mxu0 %v1915
    %1934 = vmatprep.subr.mxu0 0.0
    %1935 = vmatpush1.msra.mxu0 %v1914
    %1936 = vmatprep.subr.mxu0 0.0
    %1937 = vmatpush1.msra.mxu0 %v1913
    %1938 = vmatprep.subr.mxu0 0.0
    %1939 = vmatpush1.msra.mxu0 %v1912
    %1940 = vmatprep.subr.mxu0 0.0
    %1941 = vmatpush1.msra.mxu0 %v1911
    %1942 = vmatprep.subr.mxu0 0.0
    %1943 = vmatpush1.msra.mxu0 %v1910
    %1944 = vmatprep.subr.mxu0 0.0
    %1945 = vmatpush1.msra.mxu0 %v1909
    %1946 = vmatprep.subr.mxu0 0.0
    %1947 = vmatpush1.msra.mxu0 %v1908
    %1948 = vmatprep.subr.mxu0 0.0
    %1949 = vmatpush1.msra.mxu0 %v1907
    %1950 = vmatprep.subr.mxu0 0.0
    %1951 = vmatpush1.msra.mxu0 %v1906
    %1952 = vmatprep.subr.mxu0 0.0
    %1953 = vmatpush1.msra.mxu0 %v1905
    %1954 = vmatprep.subr.mxu0 0.0
    %1955 = vmatpush1.msra.mxu0 %v1904
    %1956 = vmatprep.subr.mxu0 0.0
    %1957 = vmatpush1.msra.mxu0 %v1903
    %1958 = vmatprep.subr.mxu0 0.0
    %1959 = vmatpush1.msra.mxu0 %v1902
    %1960 = vmatprep.subr.mxu0 0.0
    %1961 = vmatpush2.msra.mxu0 0.0
    %1962 = vmatprep.subr.mxu0 0.0
    %1963 = vmatpush2.msra.mxu0 0.0
    %1964 = vmatprep.subr.mxu0 0.0
    %1965 = vmatpush2.msra.mxu0 0.0
    %1966 = vmatprep.subr.mxu0 0.0
    %1967 = vmatpush2.msra.mxu0 0.0
    %1968 = vmatprep.subr.mxu0 0.0
    %1969 = vmatpush2.msra.mxu0 0.0
    %1970 = vmatprep.subr.mxu0 0.0
    %1971 = vmatpush2.msra.mxu0 0.0
    %1972 = vmatprep.subr.mxu0 0.0
    %1973 = vmatpush2.msra.mxu0 0.0
    %1974 = vmatprep.subr.mxu0 0.0
    %1975 = vmatpush2.msra.mxu0 0.0
    %1976 = vmatprep.subr.mxu0 0.0
    %1977 = vmatpush2.msra.mxu0 0.0
    %1978 = vmatprep.subr.mxu0 0.0
    %1979 = vmatpush2.msra.mxu0 0.0
    %1980 = vmatprep.subr.mxu0 0.0
    %1981 = vmatpush2.msra.mxu0 0.0
    %1982 = vmatprep.subr.mxu0 0.0
    %1983 = vmatpush2.msra.mxu0 0.0
    %1984 = vmatprep.subr.mxu0 0.0
    %1985 = vmatpush2.msra.mxu0 0.0
    %1986 = vmatprep.subr.mxu0 0.0
    %1987 = vmatpush2.msra.mxu0 0.0
    %1988 = vmatprep.subr.mxu0 0.0
    %1989 = vmatpush2.msra.mxu0 0.0
    %1990 = vmatprep.subr.mxu0 0.0
    %1991 = vmatpush2.msra.mxu0 0.0
    %1992 = vmatprep.mubr.f32.mxu0 0.0
    %1993 = vmatmul.mubr.f32.gmra.mxu0 %v1926
    %v1994 = vpop.f32.mrf.mxu0
    %v1995 = vadd.f32 %v1922, %v1994
    %v1996 = vpop.f32.mrf.mxu0
    %1997 = vdwg.mxu0
    %v1998 = vtanh.pop %v1995
    %v1999 = vld [vmem:[%s9] sm:$0xff]
    %v2000 = vld [vmem:[%s9 + $0x8] sm:$0xff]
    %v2001 = vld [vmem:[%s9 + $0x10] sm:$0xff]
    %v2002 = vld [vmem:[%s9 + $0x18] sm:$0xff]
    %v2003 = vld [vmem:[%s9 + $0x20] sm:$0xff]
    %v2004 = vld [vmem:[%s9 + $0x28] sm:$0xff]
    %v2005 = vld [vmem:[%s9 + $0x30] sm:$0xff]
    %v2006 = vld [vmem:[%s9 + $0x38] sm:$0xff]
    %v2007 = vld [vmem:[%s9 + $0x40] sm:$0xff]
    %v2008 = vld [vmem:[%s9 + $0x48] sm:$0xff]
    %v2009 = vld [vmem:[%s9 + $0x50] sm:$0xf]
    %v2010 = vld [vmem:[%s10] sm:$0x1]
    %v2012 = vlaneseq
    %v2013 = vshrl.u32 %v2012, 7
    %v2014 = vsub.s32 0, %v2013
    %v2015 = vrot.slane %v2010, %v2014
    %v2018 = vsel %vm523, %v1998, 0
    %v2021 = vsel %vm519, %v2009, 0
    %2023 = vmatprep.subr.mxu0 0.0
    %2024 = vmatpush1.msra.mxu0 0.0
    %2025 = vmatprep.subr.mxu0 0.0
    %2026 = vmatpush1.msra.mxu0 0.0
    %2027 = vmatprep.subr.mxu0 0.0
    %2028 = vmatpush1.msra.mxu0 0.0
    %2029 = vmatprep.subr.mxu0 0.0
    %2030 = vmatpush1.msra.mxu0 0.0
    %2031 = vmatprep.subr.mxu0 0.0
    %2032 = vmatpush1.msra.mxu0 0.0
    %2033 = vmatprep.subr.mxu0 0.0
    %2034 = vmatpush1.msra.mxu0 %v2021
    %2035 = vmatprep.subr.mxu0 0.0
    %2036 = vmatpush1.msra.mxu0 %v2008
    %2037 = vmatprep.subr.mxu0 0.0
    %2038 = vmatpush1.msra.mxu0 %v2007
    %2039 = vmatprep.subr.mxu0 0.0
    %2040 = vmatpush1.msra.mxu0 %v2006
    %2041 = vmatprep.subr.mxu0 0.0
    %2042 = vmatpush1.msra.mxu0 %v2005
    %2043 = vmatprep.subr.mxu0 0.0
    %2044 = vmatpush1.msra.mxu0 %v2004
    %2045 = vmatprep.subr.mxu0 0.0
    %2046 = vmatpush1.msra.mxu0 %v2003
    %2047 = vmatprep.subr.mxu0 0.0
    %2048 = vmatpush1.msra.mxu0 %v2002
    %2049 = vmatprep.subr.mxu0 0.0
    %2050 = vmatpush1.msra.mxu0 %v2001
    %2051 = vmatprep.subr.mxu0 0.0
    %2052 = vmatpush1.msra.mxu0 %v2000
    %2053 = vmatprep.subr.mxu0 0.0
    %2054 = vmatpush1.msra.mxu0 %v1999
    %2055 = vmatprep.subr.mxu0 0.0
    %2056 = vmatpush2.msra.mxu0 0.0
    %2057 = vmatprep.subr.mxu0 0.0
    %2058 = vmatpush2.msra.mxu0 0.0
    %2059 = vmatprep.subr.mxu0 0.0
    %2060 = vmatpush2.msra.mxu0 0.0
    %2061 = vmatprep.subr.mxu0 0.0
    %2062 = vmatpush2.msra.mxu0 0.0
    %2063 = vmatprep.subr.mxu0 0.0
    %2064 = vmatpush2.msra.mxu0 0.0
    %2065 = vmatprep.subr.mxu0 0.0
    %2066 = vmatpush2.msra.mxu0 0.0
    %2067 = vmatprep.subr.mxu0 0.0
    %2068 = vmatpush2.msra.mxu0 0.0
    %2069 = vmatprep.subr.mxu0 0.0
    %2070 = vmatpush2.msra.mxu0 0.0
    %2071 = vmatprep.subr.mxu0 0.0
    %2072 = vmatpush2.msra.mxu0 0.0
    %2073 = vmatprep.subr.mxu0 0.0
    %2074 = vmatpush2.msra.mxu0 0.0
    %2075 = vmatprep.subr.mxu0 0.0
    %2076 = vmatpush2.msra.mxu0 0.0
    %2077 = vmatprep.subr.mxu0 0.0
    %2078 = vmatpush2.msra.mxu0 0.0
    %2079 = vmatprep.subr.mxu0 0.0
    %2080 = vmatpush2.msra.mxu0 0.0
    %2081 = vmatprep.subr.mxu0 0.0
    %2082 = vmatpush2.msra.mxu0 0.0
    %2083 = vmatprep.subr.mxu0 0.0
    %2084 = vmatpush2.msra.mxu0 0.0
    %2085 = vmatprep.subr.mxu0 0.0
    %2086 = vmatpush2.msra.mxu0 0.0
    %2087 = vmatprep.mubr.f32.mxu0 0.0
    %2088 = vmatmul.mubr.f32.gmra.mxu0 %v2018
    %v2089 = vpop.f32.mrf.mxu0
    %v2090 = vadd.f32 %v2015, %v2089
    %v2091 = vpop.f32.mrf.mxu0
    %2092 = vdwg.mxu0
    %2093 = vst [vmem:[#allocation2] sm:$0x3] %v2090
    // Predicated region
    $region46: #{lenet5_forward.1} parent=1 // pred_check
      _
    $region47: #{lenet5_forward.1} parent=1 // pred_check_branch
      %2095 = sbr.rel (0) target = $region49
    $region48: #{lenet5_forward.1} parent=1 // pred_region
      %s2097 = ssub.s32 32, 32
      %2098 = vsyncadd [#allocation3], %s2097
      %s2100 = sshll.u32 [#allocation2], 4
      %s2101 = int_to_ptr.vmem [resolvable:$true] %s2100
      %2103 = dma.vmem_to_hbm [thread:$0]  %s2101, 32, %s11, [#allocation3]
    $region49: #{lenet5_forward.1} parent=1 // pred_fallthru
      _
    // Predicated region
    $region50: #{lenet5_forward.1} parent=1 // pred_check
      _
    $region51: #{lenet5_forward.1} parent=1 // pred_check_branch
      %2105 = sbr.rel (0) target = $region53
    $region52: #{lenet5_forward.1} parent=1 // pred_region
      %2106 = dma.done [#allocation3], 32
    $region53: #{lenet5_forward.1} parent=1 // pred_fallthru
      _
    %2107 = vsyncpa [#allocation3], 1

</llo_original>
